<compile_context>
chip_gen: v7x
topology: tpu7x:2x2x1
jax: 0.10.0
libtpu: 0.0.40
codegen_flags: <defaults>
</compile_context>

<pallas_src>
import jax
import jax.numpy as jnp
from jax.experimental import pallas as pl
from jax.experimental.pallas import tpu as pltpu


# ----------------------------------------------------------------------------
# Pallas kernel
# ----------------------------------------------------------------------------
def nae_kernel(x1_ref, x2_ref, w1_ref, b1_ref, w2_ref, b2_ref, r_ref,
               emb_ref, norm_ref):
    d1 = w1_ref.shape[1]
    d2 = w2_ref.shape[1]
    cdt = w1_ref.dtype                      # MXU compute dtype (bf16)

    # Projector branches: Linear (+ folded eval-mode BatchNorm1d), f32 accumulation.
    e1 = jnp.dot(x1_ref[...].astype(cdt), w1_ref[...],
                 preferred_element_type=jnp.float32) + b1_ref[...]
    e2 = jnp.dot(x2_ref[...].astype(cdt), w2_ref[...],
                 preferred_element_type=jnp.float32) + b2_ref[...]

    sq1 = e1 * e1
    sq2 = e2 * e2

    # Column form (TM, 1): per-row L2 norm of the (virtual) concat [e1 | e2],
    # used to normalize the embedding rows (broadcast along lanes).
    sumsq_col = (jnp.sum(sq1, axis=1, keepdims=True)
                 + jnp.sum(sq2, axis=1, keepdims=True))
    norms_col = jnp.sqrt(sumsq_col)
    # embeddings / norms.clamp(min=1e-12): multiply by EUP reciprocal (free slot).
    inv = pl.reciprocal(jnp.maximum(norms_col, 1e-12), approx=True)

    if d1 % 128 == 0:
        # Lane-aligned split: write each branch straight into its slice (no concat).
        emb_ref[:, :d1] = (e1 * inv).astype(emb_ref.dtype)
        emb_ref[:, d1:] = (e2 * inv).astype(emb_ref.dtype)
    else:
        # Misaligned split would cross (8,128) tile boundaries -> masked partial
        # stores + relayout; one full-width store of the concatenated tile instead.
        emb_ref[...] = (jnp.concatenate([e1, e2], axis=1) * inv).astype(emb_ref.dtype)

    # Row form (1, TM): lane-dense norm logits.  Computed on the MXU (which has
    # ample slack in this memory-bound kernel) by contracting the squared
    # embeddings with a ones vector in A @ B^T form — no XLU transpose of the
    # (TM, 1) column needed.  HIGHEST precision keeps f32 accuracy of the sum.
    ones1 = jnp.ones((1, d1), jnp.float32)
    ones2 = jnp.ones((1, d2), jnp.float32)
    dn = (((1,), (1,)), ((), ()))
    sumsq_row = (
        jax.lax.dot_general(ones1, sq1, dn,
                            precision=jax.lax.Precision.HIGHEST,
                            preferred_element_type=jnp.float32)
        + jax.lax.dot_general(ones2, sq2, dn,
                              precision=jax.lax.Precision.HIGHEST,
                              preferred_element_type=jnp.float32))
    # Rescaler BatchNorm1d(1) in eval mode, folded to an affine: n*scale + shift.
    norm_ref[0] = jnp.sqrt(sumsq_row) * r_ref[0] + r_ref[1]


# ----------------------------------------------------------------------------
# Wrapper: parameter folding (glue) + pallas_call
# ----------------------------------------------------------------------------
def _round_up(x, m):
    return (x + m - 1) // m * m


def norm_aware_embedding(featmaps, params, *, max_tile_m=1024):
    """featmaps: dict of NCHW tensors with H=W=1.  Returns (embeddings, norms)."""
    (k1, v1), (k2, v2) = featmaps.items()

    # _flatten_fc_input: (N, C, 1, 1) -> (N, C).  No dtype cast here (extra HBM
    # pass); the kernel casts to the compute dtype.
    x1 = v1.reshape(v1.shape[0], -1)
    x2 = v2.reshape(v2.shape[0], -1)
    N = x1.shape[0]

    w1, b1 = params[k1]          # (C1, d1) bf16, (1, d1) f32  -- BN folded in
    w2, b2 = params[k2]          # (C2, d2) bf16, (1, d2) f32
    r = params["rescaler"]       # (2,) f32: [scale, shift]
    C1, d1 = w1.shape
    C2, d2 = w2.shape
    D = d1 + d2

    # Balanced row tiling (no padding of N, no output re-slice):
    #   * tile count >= 2 (and even) when there is enough work so both v7x TCs
    #     get rows under dimension_semantics=("parallel",);
    #   * equal-sized tiles, each a multiple of 16 rows (bf16 sublane packing),
    #     capped at max_tile_m (VMEM is a non-issue: <10 MiB even at TM=1024);
    #   * the ragged last block is handled by Pallas masking (row-wise math, so
    #     masked/garbage rows only affect their own discarded outputs).
    min_tiles = 2 if N > 16 else 1
    n_tiles = max(pl.cdiv(N, max_tile_m), min_tiles)
    if n_tiles > 1:
        n_tiles = _round_up(n_tiles, 2)
    TM = min(_round_up(pl.cdiv(N, n_tiles), 16), _round_up(N, 8))
    grid_m = pl.cdiv(N, TM)

    itemsize = lambda a: a.size * a.dtype.itemsize
    cost = pl.CostEstimate(
        flops=int(2 * N * (C1 * d1 + C2 * d2)),
        transcendentals=int(3 * N),                       # sqrt x2 + rcp per row
        bytes_accessed=int(itemsize(x1) + itemsize(x2) + itemsize(w1)
                           + itemsize(w2) + itemsize(b1) + itemsize(b2)
                           + N * D * 2 + grid_m * TM * 4),
    )

    emb, norm_out = pl.pallas_call(
        nae_kernel,
        grid=(grid_m,),
        out_shape=(
            jax.ShapeDtypeStruct((N, D), jnp.bfloat16),        # bf16 embeddings
            jax.ShapeDtypeStruct((grid_m, 1, TM), jnp.float32),  # lane-dense logits
        ),
        in_specs=[
            pl.BlockSpec((TM, C1), lambda i: (i, 0)),   # x1: row-tiled
            pl.BlockSpec((TM, C2), lambda i: (i, 0)),   # x2: row-tiled
            pl.BlockSpec((C1, d1), lambda i: (0, 0)),   # w1: VMEM-resident
            pl.BlockSpec((1, d1), lambda i: (0, 0)),    # b1: VMEM-resident
            pl.BlockSpec((C2, d2), lambda i: (0, 0)),   # w2: VMEM-resident
            pl.BlockSpec((1, d2), lambda i: (0, 0)),    # b2: VMEM-resident
            pl.BlockSpec(memory_space=pltpu.MemorySpace.SMEM),  # rescaler scalars
        ],
        out_specs=(
            pl.BlockSpec((TM, D), lambda i: (i, 0)),
            pl.BlockSpec((1, 1, TM), lambda i: (i, 0, 0)),
        ),
        compiler_params=pltpu.CompilerParams(
            # Independent row tiles -> shard across both TCs on v7x (no-op on v5e/v6e).
            dimension_semantics=("parallel",),
        ),
        cost_estimate=cost,
    )(x1, x2, w1, b1, w2, b2, r)

    # Logits were written lane-dense per tile; flatten and drop ragged-tile lanes
    # (tiny: 4 bytes/row).  Embeddings come back at exactly (N, D) — no re-slice.
    norms = norm_out.reshape(-1)[:N]
    return emb, norms


def make_params(key, featmap_names, in_channels, indv_dims, bn_eps=1e-5,
                compute_dtype=jnp.bfloat16):
    """Deterministic init mirroring the PyTorch __init__, with eval-mode BN
    (running_mean=0, running_var=1) folded into the Linear weights.  Folded
    weights are stored in bf16 (one-time glue); biases stay f32."""
    params = {}
    for ftname, c_in, d in zip(featmap_names, in_channels, indv_dims):
        key, kw, kg = jax.random.split(key, 3)
        # nn.Linear(c_in, d): weight (d, c_in) ~ N(0, 0.01), bias = 0
        w_lin = 0.01 * jax.random.normal(kw, (d, c_in), dtype=jnp.float32)
        b_lin = jnp.zeros((d,), dtype=jnp.float32)
        # nn.BatchNorm1d(d): weight ~ N(0, 0.01), bias = 0, rm = 0, rv = 1
        gamma = 0.01 * jax.random.normal(kg, (d,), dtype=jnp.float32)
        beta = jnp.zeros((d,), dtype=jnp.float32)
        rm = jnp.zeros((d,), dtype=jnp.float32)
        rv = jnp.ones((d,), dtype=jnp.float32)
        # Fold BN (eval mode) into the linear:  y = (xW^T + b - rm)/sqrt(rv+eps)*g + beta
        bn_scale = gamma / jnp.sqrt(rv + bn_eps)                          # (d,)
        w_folded = (w_lin.T * bn_scale[None, :]).astype(compute_dtype)    # (c_in, d)
        b_folded = ((b_lin - rm) * bn_scale + beta)[None, :]              # (1, d) f32
        params[ftname] = (w_folded, b_folded)

    # Rescaler: nn.BatchNorm1d(1, affine=True), eval mode: gamma=1, beta=0, rm=0, rv=1
    g_r, b_r, rm_r, rv_r = 1.0, 0.0, 0.0, 1.0
    r_scale = g_r / jnp.sqrt(jnp.float32(rv_r) + bn_eps)
    r_shift = jnp.float32(b_r - rm_r * r_scale)
    params["rescaler"] = jnp.array([r_scale, r_shift], dtype=jnp.float32)
    return params


if __name__ == "__main__":
    # Small, TPU-friendly shapes consistent with the module:
    # featmap_names=['feat_res3','feat_res4'], in_channels scaled down to [128, 256],
    # dim=[256] -> _split_embedding_dim gives indv_dims=[128, 128].
    # TODO(synk): only the default config path (shared rescaler, two featmaps,
    # no bn_feature_seperately / multi_part_matching) is implemented.
    featmap_names = ["feat_res3", "feat_res4"]
    in_channels = [128, 256]
    indv_dims = [128, 128]
    N = 8

    key = jax.random.PRNGKey(0)
    key, k1, k2, kp = jax.random.split(key, 4)
    # Feed bf16 featmaps directly: halves HBM traffic of the dominant input
    # streams on this memory-bound op (no wrapper-side cast pass).
    featmaps = {
        "feat_res3": jax.random.normal(k1, (N, in_channels[0], 1, 1),
                                       dtype=jnp.bfloat16),
        "feat_res4": jax.random.normal(k2, (N, in_channels[1], 1, 1),
                                       dtype=jnp.bfloat16),
    }
    params = make_params(kp, featmap_names, in_channels, indv_dims)

    emb, norms = norm_aware_embedding(featmaps, params)
    jax.block_until_ready((emb, norms))

    # Reference in plain JAX using the same bf16 inputs/weights and f32 accumulation.
    x1 = featmaps["feat_res3"].reshape(N, -1)
    x2 = featmaps["feat_res4"].reshape(N, -1)
    w1, b1 = params["feat_res3"]
    w2, b2 = params["feat_res4"]
    e_ref = jnp.concatenate(
        [jnp.dot(x1, w1, preferred_element_type=jnp.float32) + b1,
         jnp.dot(x2, w2, preferred_element_type=jnp.float32) + b2], axis=1)
    n_ref = jnp.sqrt(jnp.sum(e_ref * e_ref, axis=1, keepdims=True))
    emb_ref = e_ref / jnp.maximum(n_ref, 1e-12)
    r = params["rescaler"]
    norms_ref = n_ref[:, 0] * r[0] + r[1]

    # Embeddings: approx reciprocal (~1e-3 rel) + bf16 output rounding (~2e-3 rel).
    assert jnp.allclose(emb.astype(jnp.float32), emb_ref,
                        atol=4e-3, rtol=1e-2), "embeddings mismatch"
    # Norm logits: exact sqrt of an f32 sum-of-squares (MXU HIGHEST-precision row
    # reduction vs XLA reduction order -> tiny differences allowed).
    assert jnp.allclose(norms, norms_ref, atol=1e-4, rtol=5e-3), "norm logits mismatch"

    print("KERNEL_OK")
</pallas_src>

<mosaic_0001>
module attributes {stable_mosaic.version = 11 : i64} {
  func.func @nae_kernel(%arg0: i32, %arg1: memref<8x128xbf16, #tpu.memory_space<vmem>>, %arg2: memref<8x256xbf16, #tpu.memory_space<vmem>>, %arg3: memref<128x128xbf16, #tpu.memory_space<vmem>>, %arg4: memref<1x128xf32, #tpu.memory_space<vmem>>, %arg5: memref<256x128xbf16, #tpu.memory_space<vmem>>, %arg6: memref<1x128xf32, #tpu.memory_space<vmem>>, %arg7: memref<2xf32, #tpu.memory_space<smem>>, %arg8: memref<8x256xbf16, #tpu.memory_space<vmem>>, %arg9: memref<1x1x8xf32, #tpu.memory_space<vmem>>) attributes {dimension_semantics = [#tpu.dimension_semantics<parallel>], iteration_bounds = array<i64: 1>, scalar_prefetch = 0 : i64, scratch_operands = 0 : i64, tpu.core_type = #tpu.core_type<tc>, window_params = [{transform_indices = @transform_0, window_bounds = array<i64: 8, 128>}, {transform_indices = @transform_1, window_bounds = array<i64: 8, 256>}, {pipeline_mode = #tpu.pipeline_mode<synchronous>, transform_indices = @transform_2, window_bounds = array<i64: 128, 128>}, {pipeline_mode = #tpu.pipeline_mode<synchronous>, transform_indices = @transform_3, window_bounds = array<i64: 1, 128>}, {pipeline_mode = #tpu.pipeline_mode<synchronous>, transform_indices = @transform_4, window_bounds = array<i64: 256, 128>}, {pipeline_mode = #tpu.pipeline_mode<synchronous>, transform_indices = @transform_5, window_bounds = array<i64: 1, 128>}, {transform_indices = @transform_6, window_bounds = array<i64: 2>}, {transform_indices = @transform_7, window_bounds = array<i64: 8, 256>}, {transform_indices = @transform_8, window_bounds = array<i64: 1, 1, 8>}]} {
    %c0 = arith.constant 0 : index
    %c0_0 = arith.constant 0 : index
    %0 = vector.load %arg1[%c0, %c0_0] : memref<8x128xbf16, #tpu.memory_space<vmem>>, vector<8x128xbf16>
    %c0_1 = arith.constant 0 : index
    %c0_2 = arith.constant 0 : index
    %1 = vector.load %arg3[%c0_1, %c0_2] : memref<128x128xbf16, #tpu.memory_space<vmem>>, vector<128x128xbf16>
    %cst = arith.constant dense<0.000000e+00> : vector<8x128xf32>
    %2 = tpu.matmul %0, %1, %cst {dimension_numbers = #tpu.dot_dimension_numbers<[1], [0], [0], [1], [0, 0, 1, 1], [], []>} : vector<8x128xbf16>, vector<128x128xbf16>, vector<8x128xf32> -> vector<8x128xf32>
    %c0_3 = arith.constant 0 : index
    %c0_4 = arith.constant 0 : index
    %3 = vector.load %arg4[%c0_3, %c0_4] : memref<1x128xf32, #tpu.memory_space<vmem>>, vector<1x128xf32>
    %4 = vector.broadcast %3 : vector<1x128xf32> to vector<8x128xf32>
    %5 = arith.addf %2, %4 : vector<8x128xf32>
    %c0_5 = arith.constant 0 : index
    %c0_6 = arith.constant 0 : index
    %6 = vector.load %arg2[%c0_5, %c0_6] : memref<8x256xbf16, #tpu.memory_space<vmem>>, vector<8x256xbf16>
    %c0_7 = arith.constant 0 : index
    %c0_8 = arith.constant 0 : index
    %7 = vector.load %arg5[%c0_7, %c0_8] : memref<256x128xbf16, #tpu.memory_space<vmem>>, vector<256x128xbf16>
    %cst_9 = arith.constant dense<0.000000e+00> : vector<8x128xf32>
    %8 = tpu.matmul %6, %7, %cst_9 {dimension_numbers = #tpu.dot_dimension_numbers<[1], [0], [0], [1], [0, 0, 1, 1], [], []>} : vector<8x256xbf16>, vector<256x128xbf16>, vector<8x128xf32> -> vector<8x128xf32>
    %c0_10 = arith.constant 0 : index
    %c0_11 = arith.constant 0 : index
    %9 = vector.load %arg6[%c0_10, %c0_11] : memref<1x128xf32, #tpu.memory_space<vmem>>, vector<1x128xf32>
    %10 = vector.broadcast %9 : vector<1x128xf32> to vector<8x128xf32>
    %11 = arith.addf %8, %10 : vector<8x128xf32>
    %12 = arith.mulf %5, %5 : vector<8x128xf32>
    %13 = arith.mulf %11, %11 : vector<8x128xf32>
    %cst_12 = arith.constant dense<0.000000e+00> : vector<8xf32>
    %14 = vector.multi_reduction <add>, %12, %cst_12 [1] : vector<8x128xf32> to vector<8xf32>
    %15 = vector.shape_cast %14 : vector<8xf32> to vector<8x1xf32>
    %cst_13 = arith.constant dense<0.000000e+00> : vector<8xf32>
    %16 = vector.multi_reduction <add>, %13, %cst_13 [1] : vector<8x128xf32> to vector<8xf32>
    %17 = vector.shape_cast %16 : vector<8xf32> to vector<8x1xf32>
    %18 = arith.addf %15, %17 : vector<8x1xf32>
    %19 = math.sqrt %18 : vector<8x1xf32>
    %cst_14 = arith.constant 9.99999996E-13 : f32
    %20 = vector.broadcast %cst_14 : f32 to vector<8x1xf32>
    %21 = arith.maximumf %19, %20 : vector<8x1xf32>
    %22 = tpu.reciprocal %21 {approx = true} : vector<8x1xf32> -> vector<8x1xf32>
    %23 = vector.broadcast %22 : vector<8x1xf32> to vector<8x128xf32>
    %24 = arith.mulf %5, %23 : vector<8x128xf32>
    %25 = arith.truncf %24 : vector<8x128xf32> to vector<8x128xbf16>
    %c0_15 = arith.constant 0 : index
    %c0_16 = arith.constant 0 : index
    %26 = vector.load %arg8[%c0_15, %c0_16] : memref<8x256xbf16, #tpu.memory_space<vmem>>, vector<8x128xbf16>
    tpu.vector_store %arg8[%c0_15, %c0_16], %25 {strides = array<i32>} : memref<8x256xbf16, #tpu.memory_space<vmem>>, vector<8x128xbf16>,
    %27 = vector.broadcast %22 : vector<8x1xf32> to vector<8x128xf32>
    %28 = arith.mulf %11, %27 : vector<8x128xf32>
    %29 = arith.truncf %28 : vector<8x128xf32> to vector<8x128xbf16>
    %c0_17 = arith.constant 0 : index
    %c128 = arith.constant 128 : index
    %30 = vector.load %arg8[%c0_17, %c128] : memref<8x256xbf16, #tpu.memory_space<vmem>>, vector<8x128xbf16>
    tpu.vector_store %arg8[%c0_17, %c128], %29 {strides = array<i32>} : memref<8x256xbf16, #tpu.memory_space<vmem>>, vector<8x128xbf16>,
    %cst_18 = arith.constant 1.000000e+00 : f32
    %31 = vector.broadcast %cst_18 : f32 to vector<1x128xf32>
    %cst_19 = arith.constant 1.000000e+00 : f32
    %32 = vector.broadcast %cst_19 : f32 to vector<1x128xf32>
    %cst_20 = arith.constant dense<0.000000e+00> : vector<1x8xf32>
    %33 = tpu.matmul %31, %12, %cst_20 {dimension_numbers = #tpu.dot_dimension_numbers<[1], [1], [0], [0], [0, 0, 1, 0], [], []>, precision = #tpu.contract_precision<fp32>} : vector<1x128xf32>, vector<8x128xf32>, vector<1x8xf32> -> vector<1x8xf32>
    %cst_21 = arith.constant dense<0.000000e+00> : vector<1x8xf32>
    %34 = tpu.matmul %32, %13, %cst_21 {dimension_numbers = #tpu.dot_dimension_numbers<[1], [1], [0], [0], [0, 0, 1, 0], [], []>, precision = #tpu.contract_precision<fp32>} : vector<1x128xf32>, vector<8x128xf32>, vector<1x8xf32> -> vector<1x8xf32>
    %35 = arith.addf %33, %34 : vector<1x8xf32>
    %36 = math.sqrt %35 : vector<1x8xf32>
    %c0_22 = arith.constant 0 : index
    %37 = memref.load %arg7[%c0_22] : memref<2xf32, #tpu.memory_space<smem>>
    %38 = vector.broadcast %37 : f32 to vector<1x8xf32>
    %39 = arith.mulf %36, %38 : vector<1x8xf32>
    %c1 = arith.constant 1 : index
    %40 = memref.load %arg7[%c1] : memref<2xf32, #tpu.memory_space<smem>>
    %41 = vector.broadcast %40 : f32 to vector<1x8xf32>
    %42 = arith.addf %39, %41 : vector<1x8xf32>
    %c0_23 = arith.constant 0 : index
    %c0_24 = arith.constant 0 : index
    %c0_25 = arith.constant 0 : index
    %43 = vector.load %arg9[%c0_23, %c0_24, %c0_25] : memref<1x1x8xf32, #tpu.memory_space<vmem>>, vector<1x1x8xf32>
    %44 = vector.shape_cast %43 : vector<1x1x8xf32> to vector<1x8xf32>
    %45 = vector.shape_cast %42 : vector<1x8xf32> to vector<1x1x8xf32>
    tpu.vector_store %arg9[%c0_23, %c0_24, %c0_25], %45 {strides = array<i32>} : memref<1x1x8xf32, #tpu.memory_space<vmem>>, vector<1x1x8xf32>,
    return
  }
  func.func @transform_0(%arg0: i32) -> (i32, i32) {
    %c0_i32 = arith.constant 0 : i32
    %c0_i32_0 = arith.constant 0 : i32
    return %arg0, %c0_i32 : i32, i32
  }
  func.func @transform_1(%arg0: i32) -> (i32, i32) {
    %c0_i32 = arith.constant 0 : i32
    %c0_i32_0 = arith.constant 0 : i32
    return %arg0, %c0_i32 : i32, i32
  }
  func.func @transform_2(%arg0: i32) -> (i32, i32) {
    %c0_i32 = arith.constant 0 : i32
    %c0_i32_0 = arith.constant 0 : i32
    %c0_i32_1 = arith.constant 0 : i32
    return %c0_i32, %c0_i32_0 : i32, i32
  }
  func.func @transform_3(%arg0: i32) -> (i32, i32) {
    %c0_i32 = arith.constant 0 : i32
    %c0_i32_0 = arith.constant 0 : i32
    %c0_i32_1 = arith.constant 0 : i32
    return %c0_i32, %c0_i32_0 : i32, i32
  }
  func.func @transform_4(%arg0: i32) -> (i32, i32) {
    %c0_i32 = arith.constant 0 : i32
    %c0_i32_0 = arith.constant 0 : i32
    %c0_i32_1 = arith.constant 0 : i32
    return %c0_i32, %c0_i32_0 : i32, i32
  }
  func.func @transform_5(%arg0: i32) -> (i32, i32) {
    %c0_i32 = arith.constant 0 : i32
    %c0_i32_0 = arith.constant 0 : i32
    %c0_i32_1 = arith.constant 0 : i32
    return %c0_i32, %c0_i32_0 : i32, i32
  }
  func.func @transform_6(%arg0: i32) -> i32 {
    %c0_i32 = arith.constant 0 : i32
    %c0_i32_0 = arith.constant 0 : i32
    return %c0_i32 : i32
  }
  func.func @transform_7(%arg0: i32) -> (i32, i32) {
    %c0_i32 = arith.constant 0 : i32
    %c0_i32_0 = arith.constant 0 : i32
    return %arg0, %c0_i32 : i32, i32
  }
  func.func @transform_8(%arg0: i32) -> (i32, i32, i32) {
    %c0_i32 = arith.constant 0 : i32
    %c0_i32_0 = arith.constant 0 : i32
    %c0_i32_1 = arith.constant 0 : i32
    return %arg0, %c0_i32, %c0_i32_0 : i32, i32, i32
  }
}

</mosaic_0001>

<llo_original>
// kernel: tpu_custom_call.1
$region0: #{tpu_custom_call.1}
  #allocation0 [shape = 'u32[]', space=smem, size = 0x4, offset = 0x4, fixed_abs, tag = 'smem constant byte address 0x4 - core index']
  #allocation1 [shape = 'u32[144,128]{1,0:T(1,128)}', space=vmem, size = 0x12000, scoped, tag = 'internal scratch']
  %s0 = inlined_call_operand.hbm [shape: bf16[8,128], index: 0, kind: input, shape index: {}]
  %s1 = inlined_call_operand.hbm [shape: bf16[8,256], index: 1, kind: input, shape index: {}]
  %s2 = inlined_call_operand.hbm [shape: bf16[128,128], index: 2, kind: input, shape index: {}]
  %s3 = inlined_call_operand.vmem [shape: f32[1,128], index: 3, kind: input, shape index: {}]
  %s4 = inlined_call_operand.hbm [shape: bf16[256,128], index: 4, kind: input, shape index: {}]
  %s5 = inlined_call_operand.vmem [shape: f32[1,128], index: 5, kind: input, shape index: {}]
  %s6 = inlined_call_operand.vmem [shape: f32[2], index: 6, kind: input, shape index: {}]
  %s7 = inlined_call_operand.hbm [shape: bf16[8,256], index: 7, kind: output, shape index: {0}]
  %s8 = inlined_call_operand.hbm [shape: f32[1,1,8], index: 8, kind: output, shape index: {1}]
  %9 = xla_tuple %s7, %s8
  %s10 = sld [smem:[#allocation0]]
  $region66: #{tpu_custom_call.1} parent=0
    _
  %s12 = ssub.s32 1, %s10
  %s13 = scalar_select 0, %s12, %s10
  $region1: #{tpu_custom_call.1} parent=0
    #allocation2 [shape = 'u8[2048]{0}', space=vmem, size = 0x800, scoped, tag = 'input window, operand 0, single buffered']
    #allocation3 [shape = 's32[1]{0}', space=sflag, size = 0x4, scoped, tag = 'scoped memory for tpu_custom_call.1']
    #allocation4 [shape = 's32[1]{0}', space=sflag, size = 0x4, scoped, tag = 'scoped memory for tpu_custom_call.1']
    #allocation5 [shape = 's32[1]{0}', space=sflag, size = 0x4, scoped, tag = 'scoped memory for tpu_custom_call.1']
    #allocation6 [shape = 'u8[4096]{0}', space=vmem, size = 0x1000, scoped, tag = 'input window, operand 1, single buffered']
    #allocation7 [shape = 's32[1]{0}', space=sflag, size = 0x4, scoped, tag = 'scoped memory for tpu_custom_call.1']
    #allocation8 [shape = 'u8[32768]{0}', space=vmem, size = 0x8000, scoped, tag = 'input window, operand 2, single buffered']
    #allocation9 [shape = 'u8[65536]{0}', space=vmem, size = 0x10000, scoped, tag = 'input window, operand 4, single buffered']
    #allocation10 [shape = 's32[1]{0}', space=sflag, size = 0x4, scoped, tag = 'scoped memory for tpu_custom_call.1']
    #allocation11 [shape = 'u8[512]{0}', space=smem, size = 0x200, scoped, tag = 'input window, operand 6, single buffered']
    #allocation12 [shape = 'u8[4096]{0}', space=vmem, size = 0x1000, scoped, tag = 'output window, operand 0, single buffered']
    #allocation13 [shape = 'u8[512]{0}', space=vmem, size = 0x400, scoped, tag = 'output window, operand 1, single buffered']
    #allocation14 [shape = 's32[1]{0}', space=sflag, size = 0x4, scoped, tag = 'scoped memory for tpu_custom_call.1']
    %14 = vsyncpa [#allocation3], 0
    %15 = vsyncpa [#allocation7], 0
    %16 = vsyncpa [#allocation10], 0
    %17 = vsyncpa [#allocation5], 0
    %18 = vsyncpa [#allocation4], 0
    %19 = vsyncpa [#allocation14], 0
    // Predicated region
    $region2: #{tpu_custom_call.1} parent=1 // pred_check
      _
    $region3: #{tpu_custom_call.1} parent=1 // pred_check_branch
      %21 = sbr.rel (0) target = $region5
    $region4: #{tpu_custom_call.1} parent=1 // pred_region
      %s23 = ssub.s32 64, 64
      %24 = vsyncadd [#allocation3], %s23
      %s26 = sshll.u32 [#allocation2], 4
      %s27 = int_to_ptr.vmem [resolvable:$true] %s26
      %29 = dma.hbm_to_vmem [thread:$0]  %s0, 64, %s27, [#allocation3]
    $region5: #{tpu_custom_call.1} parent=1 // pred_fallthru
      _
    // Predicated region
    $region6: #{tpu_custom_call.1} parent=1 // pred_check
      _
    $region7: #{tpu_custom_call.1} parent=1 // pred_check_branch
      %31 = sbr.rel (0) target = $region9
    $region8: #{tpu_custom_call.1} parent=1 // pred_region
      %s33 = ssub.s32 128, 128
      %34 = vsyncadd [#allocation7], %s33
      %s36 = sshll.u32 [#allocation6], 4
      %s37 = int_to_ptr.vmem [resolvable:$true] %s36
      %39 = dma.hbm_to_vmem [thread:$0]  %s1, 128, %s37, [#allocation7]
    $region9: #{tpu_custom_call.1} parent=1 // pred_fallthru
      _
    // Predicated region
    $region10: #{tpu_custom_call.1} parent=1 // pred_check
      _
    $region11: #{tpu_custom_call.1} parent=1 // pred_check_branch
      %41 = sbr.rel (0) target = $region13
    $region12: #{tpu_custom_call.1} parent=1 // pred_region
      %s43 = ssub.s32 1024, 1024
      %44 = vsyncadd [#allocation7], %s43
      %s45 = sshll.u32 [#allocation8], 4
      %s46 = int_to_ptr.vmem [resolvable:$true] %s45
      %51 = dma.hbm_to_vmem [thread:$0]  %s2, 1024, %s46, [#allocation7], 64, 64, 4
    $region13: #{tpu_custom_call.1} parent=1 // pred_fallthru
      _
    // Predicated region
    $region14: #{tpu_custom_call.1} parent=1 // pred_check
      _
    $region15: #{tpu_custom_call.1} parent=1 // pred_check_branch
      %53 = sbr.rel (0) target = $region17
    $region16: #{tpu_custom_call.1} parent=1 // pred_region
      _
    $region17: #{tpu_custom_call.1} parent=1 // pred_fallthru
      _
    // Predicated region
    $region18: #{tpu_custom_call.1} parent=1 // pred_check
      _
    $region19: #{tpu_custom_call.1} parent=1 // pred_check_branch
      %55 = sbr.rel (0) target = $region21
    $region20: #{tpu_custom_call.1} parent=1 // pred_region
      %s57 = ssub.s32 2048, 2048
      %58 = vsyncadd [#allocation10], %s57
      %s59 = sshll.u32 [#allocation9], 4
      %s60 = int_to_ptr.vmem [resolvable:$true] %s59
      %65 = dma.hbm_to_vmem [thread:$0]  %s4, 2048, %s60, [#allocation10], 64, 64, 4
    $region21: #{tpu_custom_call.1} parent=1 // pred_fallthru
      _
    // Predicated region
    $region22: #{tpu_custom_call.1} parent=1 // pred_check
      _
    $region23: #{tpu_custom_call.1} parent=1 // pred_check_branch
      %67 = sbr.rel (0) target = $region25
    $region24: #{tpu_custom_call.1} parent=1 // pred_region
      _
    $region25: #{tpu_custom_call.1} parent=1 // pred_fallthru
      _
    // Predicated region
    $region26: #{tpu_custom_call.1} parent=1 // pred_check
      _
    $region27: #{tpu_custom_call.1} parent=1 // pred_check_branch
      %69 = sbr.rel (0) target = $region29
    $region28: #{tpu_custom_call.1} parent=1 // pred_region
      %s71 = ssub.s32 16, 16
      %72 = vsyncadd [#allocation5], %s71
      %s74 = sshll.u32 %s6, 4
      %s75 = int_to_ptr.vmem [resolvable:$true] %s74
      %77 = dma.vmem_to_smem %s75, 16, [#allocation11], [#allocation5]
    $region29: #{tpu_custom_call.1} parent=1 // pred_fallthru
      _
    // Predicated region
    $region30: #{tpu_custom_call.1} parent=1 // pred_check
      _
    $region31: #{tpu_custom_call.1} parent=1 // pred_check_branch
      %79 = sbr.rel (0) target = $region33
    $region32: #{tpu_custom_call.1} parent=1 // pred_region
      %80 = dma.done [#allocation3], 64
    $region33: #{tpu_custom_call.1} parent=1 // pred_fallthru
      _
    // Predicated region
    $region34: #{tpu_custom_call.1} parent=1 // pred_check
      _
    $region35: #{tpu_custom_call.1} parent=1 // pred_check_branch
      %82 = sbr.rel (0) target = $region37
    $region36: #{tpu_custom_call.1} parent=1 // pred_region
      %83 = dma.done [#allocation7], 128
    $region37: #{tpu_custom_call.1} parent=1 // pred_fallthru
      _
    // Predicated region
    $region38: #{tpu_custom_call.1} parent=1 // pred_check
      _
    $region39: #{tpu_custom_call.1} parent=1 // pred_check_branch
      %85 = sbr.rel (0) target = $region41
    $region40: #{tpu_custom_call.1} parent=1 // pred_region
      %86 = dma.done [#allocation7], 1024
    $region41: #{tpu_custom_call.1} parent=1 // pred_fallthru
      _
    // Predicated region
    $region42: #{tpu_custom_call.1} parent=1 // pred_check
      _
    $region43: #{tpu_custom_call.1} parent=1 // pred_check_branch
      %88 = sbr.rel (0) target = $region45
    $region44: #{tpu_custom_call.1} parent=1 // pred_region
      %89 = dma.done [#allocation10], 2048
    $region45: #{tpu_custom_call.1} parent=1 // pred_fallthru
      _
    // Predicated region
    $region46: #{tpu_custom_call.1} parent=1 // pred_check
      _
    $region47: #{tpu_custom_call.1} parent=1 // pred_check_branch
      %91 = sbr.rel (0) target = $region49
    $region48: #{tpu_custom_call.1} parent=1 // pred_region
      %92 = dma.done [#allocation5], 16
    $region49: #{tpu_custom_call.1} parent=1 // pred_fallthru
      _
    %93 = sfence
    %v95 = vld [vmem:[#allocation2] sm:$0xf]
    %v96 = vld [vmem:[#allocation8] sm:$0xf]
    %v97 = vld [vmem:[#allocation8 + $0x4] sm:$0xf]
    %v98 = vld [vmem:[#allocation8 + $0x8] sm:$0xf]
    %v99 = vld [vmem:[#allocation8 + $0xc] sm:$0xf]
    %v100 = vld [vmem:[#allocation8 + $0x10] sm:$0xf]
    %v101 = vld [vmem:[#allocation8 + $0x14] sm:$0xf]
    %v102 = vld [vmem:[#allocation8 + $0x18] sm:$0xf]
    %v103 = vld [vmem:[#allocation8 + $0x1c] sm:$0xf]
    %v104 = vld [vmem:[#allocation8 + $0x20] sm:$0xf]
    %v105 = vld [vmem:[#allocation8 + $0x24] sm:$0xf]
    %v106 = vld [vmem:[#allocation8 + $0x28] sm:$0xf]
    %v107 = vld [vmem:[#allocation8 + $0x2c] sm:$0xf]
    %v108 = vld [vmem:[#allocation8 + $0x30] sm:$0xf]
    %v109 = vld [vmem:[#allocation8 + $0x34] sm:$0xf]
    %v110 = vld [vmem:[#allocation8 + $0x38] sm:$0xf]
    %v111 = vld [vmem:[#allocation8 + $0x3c] sm:$0xf]
    %v112 = vld [vmem:[%s3] sm:$0x1]
    %v114 = vlaneseq
    %v115 = vshrl.u32 %v114, 7
    %v116 = vsub.s32 0, %v115
    %v117 = vrot.slane %v112, %v116
    %v135 = vunpack.c.l.b16 %v96
    %v136 = vunpack.c.l.b16 %v97
    %v137 = vunpack.c.l.b16 %v98
    %v138 = vunpack.c.l.b16 %v99
    %v139 = vunpack.c.l.b16 %v100
    %v140 = vunpack.c.l.b16 %v101
    %v141 = vunpack.c.l.b16 %v102
    %v142 = vunpack.c.l.b16 %v103
    %v143 = vunpack.c.l.b16 %v104
    %v144 = vunpack.c.l.b16 %v105
    %v145 = vunpack.c.l.b16 %v106
    %v146 = vunpack.c.l.b16 %v107
    %v147 = vunpack.c.l.b16 %v108
    %v148 = vunpack.c.l.b16 %v109
    %v149 = vunpack.c.l.b16 %v110
    %v150 = vunpack.c.l.b16 %v111
    %v151 = vpack.c.b16 %v136, %v135
    %v152 = vpack.c.b16 %v138, %v137
    %v153 = vpack.c.b16 %v140, %v139
    %v154 = vpack.c.b16 %v142, %v141
    %v155 = vpack.c.b16 %v144, %v143
    %v156 = vpack.c.b16 %v146, %v145
    %v157 = vpack.c.b16 %v148, %v147
    %v158 = vpack.c.b16 %v150, %v149
    %167 = vmatprep.subr.bf16.mxu0 0
    %168 = vmatpush1.bf16.msra.mxu0 %v151
    %169 = vmatprep.subr.bf16.mxu0 0
    %170 = vmatpush1.bf16.msra.mxu0 %v152
    %171 = vmatprep.subr.bf16.mxu0 0
    %172 = vmatpush1.bf16.msra.mxu0 %v153
    %173 = vmatprep.subr.bf16.mxu0 0
    %174 = vmatpush1.bf16.msra.mxu0 %v154
    %175 = vmatprep.subr.bf16.mxu0 0
    %176 = vmatpush1.bf16.msra.mxu0 %v155
    %177 = vmatprep.subr.bf16.mxu0 0
    %178 = vmatpush1.bf16.msra.mxu0 %v156
    %179 = vmatprep.subr.bf16.mxu0 0
    %180 = vmatpush1.bf16.msra.mxu0 %v157
    %181 = vmatprep.subr.bf16.mxu0 0
    %182 = vmatpush1.bf16.msra.mxu0 %v158
    %183 = vmatprep.subr.bf16.mxu0 0
    %184 = vmatpush1.bf16.msra.mxu0 0
    %185 = vmatprep.subr.bf16.mxu0 0
    %186 = vmatpush1.bf16.msra.mxu0 0
    %187 = vmatprep.subr.bf16.mxu0 0
    %188 = vmatpush1.bf16.msra.mxu0 0
    %189 = vmatprep.subr.bf16.mxu0 0
    %190 = vmatpush1.bf16.msra.mxu0 0
    %191 = vmatprep.subr.bf16.mxu0 0
    %192 = vmatpush1.bf16.msra.mxu0 0
    %193 = vmatprep.subr.bf16.mxu0 0
    %194 = vmatpush1.bf16.msra.mxu0 0
    %195 = vmatprep.subr.bf16.mxu0 0
    %196 = vmatpush1.bf16.msra.mxu0 0
    %197 = vmatprep.subr.bf16.mxu0 0
    %198 = vmatpush1.bf16.msra.mxu0 0
    %199 = vmatprep.mubr.bf16.mxu0 0
    %200 = vmatmul.mubr.bf16.gmra.mrb[0].mxu0 %v95
    %v201 = vpop.f32.mrb[0].mxu0
    %v202 = vadd.f32 %v117, %v201
    %v203 = vpop.f32.mrb[0].mxu0
    %v204 = vpop.f32.mrb[0].mxu0
    %v205 = vpop.f32.mrb[0].mxu0
    %206 = vdwg.mxu0
    %v207 = vld [vmem:[#allocation6] sm:$0xff]
    %v208 = vld [vmem:[#allocation9] sm:$0xf]
    %v209 = vld [vmem:[#allocation9 + $0x4] sm:$0xf]
    %v210 = vld [vmem:[#allocation9 + $0x8] sm:$0xf]
    %v211 = vld [vmem:[#allocation9 + $0xc] sm:$0xf]
    %v212 = vld [vmem:[#allocation9 + $0x10] sm:$0xf]
    %v213 = vld [vmem:[#allocation9 + $0x14] sm:$0xf]
    %v214 = vld [vmem:[#allocation9 + $0x18] sm:$0xf]
    %v215 = vld [vmem:[#allocation9 + $0x1c] sm:$0xf]
    %v216 = vld [vmem:[#allocation9 + $0x20] sm:$0xf]
    %v217 = vld [vmem:[#allocation9 + $0x24] sm:$0xf]
    %v218 = vld [vmem:[#allocation9 + $0x28] sm:$0xf]
    %v219 = vld [vmem:[#allocation9 + $0x2c] sm:$0xf]
    %v220 = vld [vmem:[#allocation9 + $0x30] sm:$0xf]
    %v221 = vld [vmem:[#allocation9 + $0x34] sm:$0xf]
    %v222 = vld [vmem:[#allocation9 + $0x38] sm:$0xf]
    %v223 = vld [vmem:[#allocation9 + $0x3c] sm:$0xf]
    %v224 = vld [vmem:[#allocation9 + $0x40] sm:$0xf]
    %v225 = vld [vmem:[#allocation9 + $0x44] sm:$0xf]
    %v226 = vld [vmem:[#allocation9 + $0x48] sm:$0xf]
    %v227 = vld [vmem:[#allocation9 + $0x4c] sm:$0xf]
    %v228 = vld [vmem:[#allocation9 + $0x50] sm:$0xf]
    %v229 = vld [vmem:[#allocation9 + $0x54] sm:$0xf]
    %v230 = vld [vmem:[#allocation9 + $0x58] sm:$0xf]
    %v231 = vld [vmem:[#allocation9 + $0x5c] sm:$0xf]
    %v232 = vld [vmem:[#allocation9 + $0x60] sm:$0xf]
    %v233 = vld [vmem:[#allocation9 + $0x64] sm:$0xf]
    %v234 = vld [vmem:[#allocation9 + $0x68] sm:$0xf]
    %v235 = vld [vmem:[#allocation9 + $0x6c] sm:$0xf]
    %v236 = vld [vmem:[#allocation9 + $0x70] sm:$0xf]
    %v237 = vld [vmem:[#allocation9 + $0x74] sm:$0xf]
    %v238 = vld [vmem:[#allocation9 + $0x78] sm:$0xf]
    %v239 = vld [vmem:[#allocation9 + $0x7c] sm:$0xf]
    %v240 = vld [vmem:[%s5] sm:$0x1]
    %v242 = vlaneseq
    %v243 = vshrl.u32 %v242, 7
    %v244 = vsub.s32 0, %v243
    %v245 = vrot.slane %v240, %v244
    %v248 = vunpack.c.l.b16 %v207
    %v249 = vunpack.c.h.b16 %v207
    %v250 = vpack.c.b16 %v248, %v248
    %v251 = vpack.c.b16 %v249, %v249
    %v286 = vunpack.c.l.b16 %v208
    %v287 = vunpack.c.l.b16 %v209
    %v288 = vunpack.c.l.b16 %v210
    %v289 = vunpack.c.l.b16 %v211
    %v290 = vunpack.c.l.b16 %v212
    %v291 = vunpack.c.l.b16 %v213
    %v292 = vunpack.c.l.b16 %v214
    %v293 = vunpack.c.l.b16 %v215
    %v294 = vunpack.c.l.b16 %v216
    %v295 = vunpack.c.l.b16 %v217
    %v296 = vunpack.c.l.b16 %v218
    %v297 = vunpack.c.l.b16 %v219
    %v298 = vunpack.c.l.b16 %v220
    %v299 = vunpack.c.l.b16 %v221
    %v300 = vunpack.c.l.b16 %v222
    %v301 = vunpack.c.l.b16 %v223
    %v302 = vunpack.c.l.b16 %v224
    %v303 = vunpack.c.l.b16 %v225
    %v304 = vunpack.c.l.b16 %v226
    %v305 = vunpack.c.l.b16 %v227
    %v306 = vunpack.c.l.b16 %v228
    %v307 = vunpack.c.l.b16 %v229
    %v308 = vunpack.c.l.b16 %v230
    %v309 = vunpack.c.l.b16 %v231
    %v310 = vunpack.c.l.b16 %v232
    %v311 = vunpack.c.l.b16 %v233
    %v312 = vunpack.c.l.b16 %v234
    %v313 = vunpack.c.l.b16 %v235
    %v314 = vunpack.c.l.b16 %v236
    %v315 = vunpack.c.l.b16 %v237
    %v316 = vunpack.c.l.b16 %v238
    %v317 = vunpack.c.l.b16 %v239
    %v318 = vpack.c.b16 %v287, %v286
    %v319 = vpack.c.b16 %v289, %v288
    %v320 = vpack.c.b16 %v291, %v290
    %v321 = vpack.c.b16 %v293, %v292
    %v322 = vpack.c.b16 %v295, %v294
    %v323 = vpack.c.b16 %v297, %v296
    %v324 = vpack.c.b16 %v299, %v298
    %v325 = vpack.c.b16 %v301, %v300
    %v326 = vpack.c.b16 %v303, %v302
    %v327 = vpack.c.b16 %v305, %v304
    %v328 = vpack.c.b16 %v307, %v306
    %v329 = vpack.c.b16 %v309, %v308
    %v330 = vpack.c.b16 %v311, %v310
    %v331 = vpack.c.b16 %v313, %v312
    %v332 = vpack.c.b16 %v315, %v314
    %v333 = vpack.c.b16 %v317, %v316
    %350 = vmatprep.subr.bf16.mxu0 0
    %351 = vmatpush1.bf16.msra.mxu0 %v318
    %352 = vmatprep.subr.bf16.mxu0 0
    %353 = vmatpush1.bf16.msra.mxu0 %v319
    %354 = vmatprep.subr.bf16.mxu0 0
    %355 = vmatpush1.bf16.msra.mxu0 %v320
    %356 = vmatprep.subr.bf16.mxu0 0
    %357 = vmatpush1.bf16.msra.mxu0 %v321
    %358 = vmatprep.subr.bf16.mxu0 0
    %359 = vmatpush1.bf16.msra.mxu0 %v322
    %360 = vmatprep.subr.bf16.mxu0 0
    %361 = vmatpush1.bf16.msra.mxu0 %v323
    %362 = vmatprep.subr.bf16.mxu0 0
    %363 = vmatpush1.bf16.msra.mxu0 %v324
    %364 = vmatprep.subr.bf16.mxu0 0
    %365 = vmatpush1.bf16.msra.mxu0 %v325
    %366 = vmatprep.subr.bf16.mxu0 0
    %367 = vmatpush1.bf16.msra.mxu0 %v326
    %368 = vmatprep.subr.bf16.mxu0 0
    %369 = vmatpush1.bf16.msra.mxu0 %v327
    %370 = vmatprep.subr.bf16.mxu0 0
    %371 = vmatpush1.bf16.msra.mxu0 %v328
    %372 = vmatprep.subr.bf16.mxu0 0
    %373 = vmatpush1.bf16.msra.mxu0 %v329
    %374 = vmatprep.subr.bf16.mxu0 0
    %375 = vmatpush1.bf16.msra.mxu0 %v330
    %376 = vmatprep.subr.bf16.mxu0 0
    %377 = vmatpush1.bf16.msra.mxu0 %v331
    %378 = vmatprep.subr.bf16.mxu0 0
    %379 = vmatpush1.bf16.msra.mxu0 %v332
    %380 = vmatprep.subr.bf16.mxu0 0
    %381 = vmatpush1.bf16.msra.mxu0 %v333
    %382 = vmatprep.mubr.bf16.mxu0 %v251
    %383 = vmatmul.mubr.bf16.gmra.mrb[0].mxu0 %v250
    %v384 = vpop.f32.mrb[0].mxu0
    %v385 = vadd.f32 %v245, %v384
    %v386 = vpop.f32.mrb[0].mxu0
    %v387 = vpop.f32.mrb[0].mxu0
    %v388 = vpop.f32.mrb[0].mxu0
    %389 = vdwg.mxu0
    %v390 = vmul.f32 %v202, %v202
    %v391 = vmul.f32 %v385, %v385
    %392 = vadd.xlane.f32.xlu0 %v390
    %v393 = vpop.xlane.xlu0 %392
    %394 = vadd.xlane.f32.xlu0 %v391
    %v395 = vpop.xlane.xlu0 %394
    %v396 = vadd.f32 %v393, %v395
    %v397 = vrsqrt.pop %v396
    %v398 = vmul.f32 %v396, %v397
    %vm399 = vcmp.eq.f32.partialorder %v396, inf
    %v400 = vsel %vm399, %v396, %v398
    %vm401 = vcmp.eq.f32.partialorder %v396, 0.0
    %v402 = vand.u32 %v396, 2147483648
    %v403 = vsel %vm401, %v402, %v400
    %v404 = vmax.f32 %v403, 1e-12
    %v405 = vrcp.pop %v404
    %v406 = vmul.f32 %v202, %v405
    %v407 = vpack.c.bf16 %v406, %v406
    %408 = vst [vmem:[#allocation12] sm:$0xf] %v407
    %v409 = vmul.f32 %v385, %v405
    %v410 = vpack.c.bf16 %v409, %v409
    %411 = vst [vmem:[#allocation12 + $0x4] sm:$0xf] %v410
    %412 = vmatprep.subr.mxu0 0.0
    %v413 = vand.u32 %v391, 4294901760
    %414 = vmatpush1.xpose.msra.mxu0 %v413
    %415 = vmatprep.subr.mxu0 0.0
    %416 = vmatpush1.xpose.msra.mxu0 0.0
    %417 = vmatprep.subr.mxu0 0.0
    %418 = vmatpush1.xpose.msra.mxu0 0.0
    %419 = vmatprep.subr.mxu0 0.0
    %420 = vmatpush1.xpose.msra.mxu0 0.0
    %421 = vmatprep.subr.mxu0 0.0
    %422 = vmatpush1.xpose.msra.mxu0 0.0
    %423 = vmatprep.subr.mxu0 0.0
    %424 = vmatpush1.xpose.msra.mxu0 0.0
    %425 = vmatprep.subr.mxu0 0.0
    %426 = vmatpush1.xpose.msra.mxu0 0.0
    %427 = vmatprep.subr.mxu0 0.0
    %428 = vmatpush1.xpose.msra.mxu0 0.0
    %429 = vmatprep.subr.mxu0 0.0
    %430 = vmatpush1.xpose.msra.mxu0 0.0
    %431 = vmatprep.subr.mxu0 0.0
    %432 = vmatpush1.xpose.msra.mxu0 0.0
    %433 = vmatprep.subr.mxu0 0.0
    %434 = vmatpush1.xpose.msra.mxu0 0.0
    %435 = vmatprep.subr.mxu0 0.0
    %436 = vmatpush1.xpose.msra.mxu0 0.0
    %437 = vmatprep.subr.mxu0 0.0
    %438 = vmatpush1.xpose.msra.mxu0 0.0
    %439 = vmatprep.subr.mxu0 0.0
    %440 = vmatpush1.xpose.msra.mxu0 0.0
    %441 = vmatprep.subr.mxu0 0.0
    %442 = vmatpush1.xpose.msra.mxu0 0.0
    %443 = vmatprep.subr.mxu0 0.0
    %444 = vmatpush1.xpose.msra.mxu0 0.0
    %445 = vmatprep.subr.mxu0 0.0
    %446 = vmatpush1.xpose.msra.mxu0 0.0
    %447 = vmatprep.subr.mxu0 0.0
    %448 = vmatpush1.xpose.msra.mxu0 0.0
    %449 = vmatprep.subr.mxu0 0.0
    %450 = vmatpush1.xpose.msra.mxu0 0.0
    %451 = vmatprep.subr.mxu0 0.0
    %452 = vmatpush1.xpose.msra.mxu0 0.0
    %453 = vmatprep.subr.mxu0 0.0
    %454 = vmatpush1.xpose.msra.mxu0 0.0
    %455 = vmatprep.subr.mxu0 0.0
    %456 = vmatpush1.xpose.msra.mxu0 0.0
    %457 = vmatprep.subr.mxu0 0.0
    %458 = vmatpush1.xpose.msra.mxu0 0.0
    %459 = vmatprep.subr.mxu0 0.0
    %460 = vmatpush1.xpose.msra.mxu0 0.0
    %461 = vmatprep.subr.mxu0 0.0
    %462 = vmatpush1.xpose.msra.mxu0 0.0
    %463 = vmatprep.subr.mxu0 0.0
    %464 = vmatpush1.xpose.msra.mxu0 0.0
    %465 = vmatprep.subr.mxu0 0.0
    %466 = vmatpush1.xpose.msra.mxu0 0.0
    %467 = vmatprep.subr.mxu0 0.0
    %468 = vmatpush1.xpose.msra.mxu0 0.0
    %469 = vmatprep.subr.mxu0 0.0
    %470 = vmatpush1.xpose.msra.mxu0 0.0
    %471 = vmatprep.subr.mxu0 0.0
    %472 = vmatpush1.xpose.msra.mxu0 0.0
    %473 = vmatprep.subr.mxu0 0.0
    %474 = vmatpush1.xpose.msra.mxu0 0.0
    %475 = vmatprep.subr.mxu0 0.0
    %476 = vmatpush1.xpose.msra.mxu0 0.0
    %477 = vmatprep.mubr.f32.mxu0 0.0
    %478 = vmatmul.mubr.f32.gmra.mrb[0].mxu0 0.0
    %v479 = vpop.f32.mrb[0].mxu0
    %v480 = vadd.f32 0.0, %v479
    %v481 = vpop.f32.mrb[0].mxu0
    %482 = vdwg.mxu0
    %483 = vmatprep.subr.mxu0 0.0
    %v484 = vand.u32 %v391, 4294901760
    %v485 = vsub.f32 %v391, %v484
    %v486 = vand.u32 %v485, 4294901760
    %v487 = vsub.f32 %v485, %v486
    %v488 = vand.u32 %v487, 4294901760
    %489 = vmatpush1.xpose.msra.mxu0 %v488
    %490 = vmatprep.subr.mxu0 0.0
    %491 = vmatpush1.xpose.msra.mxu0 0.0
    %492 = vmatprep.subr.mxu0 0.0
    %493 = vmatpush1.xpose.msra.mxu0 0.0
    %494 = vmatprep.subr.mxu0 0.0
    %495 = vmatpush1.xpose.msra.mxu0 0.0
    %496 = vmatprep.subr.mxu0 0.0
    %497 = vmatpush1.xpose.msra.mxu0 0.0
    %498 = vmatprep.subr.mxu0 0.0
    %499 = vmatpush1.xpose.msra.mxu0 0.0
    %500 = vmatprep.subr.mxu0 0.0
    %501 = vmatpush1.xpose.msra.mxu0 0.0
    %502 = vmatprep.subr.mxu0 0.0
    %503 = vmatpush1.xpose.msra.mxu0 0.0
    %504 = vmatprep.subr.mxu0 0.0
    %505 = vmatpush1.xpose.msra.mxu0 0.0
    %506 = vmatprep.subr.mxu0 0.0
    %507 = vmatpush1.xpose.msra.mxu0 0.0
    %508 = vmatprep.subr.mxu0 0.0
    %509 = vmatpush1.xpose.msra.mxu0 0.0
    %510 = vmatprep.subr.mxu0 0.0
    %511 = vmatpush1.xpose.msra.mxu0 0.0
    %512 = vmatprep.subr.mxu0 0.0
    %513 = vmatpush1.xpose.msra.mxu0 0.0
    %514 = vmatprep.subr.mxu0 0.0
    %515 = vmatpush1.xpose.msra.mxu0 0.0
    %516 = vmatprep.subr.mxu0 0.0
    %517 = vmatpush1.xpose.msra.mxu0 0.0
    %518 = vmatprep.subr.mxu0 0.0
    %519 = vmatpush1.xpose.msra.mxu0 0.0
    %520 = vmatprep.subr.mxu0 0.0
    %521 = vmatpush1.xpose.msra.mxu0 0.0
    %522 = vmatprep.subr.mxu0 0.0
    %523 = vmatpush1.xpose.msra.mxu0 0.0
    %524 = vmatprep.subr.mxu0 0.0
    %525 = vmatpush1.xpose.msra.mxu0 0.0
    %526 = vmatprep.subr.mxu0 0.0
    %527 = vmatpush1.xpose.msra.mxu0 0.0
    %528 = vmatprep.subr.mxu0 0.0
    %529 = vmatpush1.xpose.msra.mxu0 0.0
    %530 = vmatprep.subr.mxu0 0.0
    %531 = vmatpush1.xpose.msra.mxu0 0.0
    %532 = vmatprep.subr.mxu0 0.0
    %533 = vmatpush1.xpose.msra.mxu0 0.0
    %534 = vmatprep.subr.mxu0 0.0
    %535 = vmatpush1.xpose.msra.mxu0 0.0
    %536 = vmatprep.subr.mxu0 0.0
    %537 = vmatpush1.xpose.msra.mxu0 0.0
    %538 = vmatprep.subr.mxu0 0.0
    %539 = vmatpush1.xpose.msra.mxu0 0.0
    %540 = vmatprep.subr.mxu0 0.0
    %541 = vmatpush1.xpose.msra.mxu0 0.0
    %542 = vmatprep.subr.mxu0 0.0
    %543 = vmatpush1.xpose.msra.mxu0 0.0
    %544 = vmatprep.subr.mxu0 0.0
    %545 = vmatpush1.xpose.msra.mxu0 0.0
    %546 = vmatprep.subr.mxu0 0.0
    %547 = vmatpush1.xpose.msra.mxu0 0.0
    %548 = vmatprep.subr.mxu0 0.0
    %549 = vmatpush1.xpose.msra.mxu0 0.0
    %550 = vmatprep.subr.mxu0 0.0
    %551 = vmatpush1.xpose.msra.mxu0 0.0
    %552 = vmatprep.mubr.f32.mxu0 0.0
    %553 = vmatmul.mubr.f32.gmra.mrb[0].mxu0 1.0
    %v554 = vpop.f32.mrb[0].mxu0
    %v555 = vadd.f32 %v480, %v554
    %v556 = vpop.f32.mrb[0].mxu0
    %557 = vdwg.mxu0
    %558 = vmatprep.subr.mxu0 0.0
    %v559 = vand.u32 %v391, 4294901760
    %v560 = vsub.f32 %v391, %v559
    %561 = vmatpush1.xpose.msra.mxu0 %v560
    %562 = vmatprep.subr.mxu0 0.0
    %563 = vmatpush1.xpose.msra.mxu0 0.0
    %564 = vmatprep.subr.mxu0 0.0
    %565 = vmatpush1.xpose.msra.mxu0 0.0
    %566 = vmatprep.subr.mxu0 0.0
    %567 = vmatpush1.xpose.msra.mxu0 0.0
    %568 = vmatprep.subr.mxu0 0.0
    %569 = vmatpush1.xpose.msra.mxu0 0.0
    %570 = vmatprep.subr.mxu0 0.0
    %571 = vmatpush1.xpose.msra.mxu0 0.0
    %572 = vmatprep.subr.mxu0 0.0
    %573 = vmatpush1.xpose.msra.mxu0 0.0
    %574 = vmatprep.subr.mxu0 0.0
    %575 = vmatpush1.xpose.msra.mxu0 0.0
    %576 = vmatprep.subr.mxu0 0.0
    %577 = vmatpush1.xpose.msra.mxu0 0.0
    %578 = vmatprep.subr.mxu0 0.0
    %579 = vmatpush1.xpose.msra.mxu0 0.0
    %580 = vmatprep.subr.mxu0 0.0
    %581 = vmatpush1.xpose.msra.mxu0 0.0
    %582 = vmatprep.subr.mxu0 0.0
    %583 = vmatpush1.xpose.msra.mxu0 0.0
    %584 = vmatprep.subr.mxu0 0.0
    %585 = vmatpush1.xpose.msra.mxu0 0.0
    %586 = vmatprep.subr.mxu0 0.0
    %587 = vmatpush1.xpose.msra.mxu0 0.0
    %588 = vmatprep.subr.mxu0 0.0
    %589 = vmatpush1.xpose.msra.mxu0 0.0
    %590 = vmatprep.subr.mxu0 0.0
    %591 = vmatpush1.xpose.msra.mxu0 0.0
    %592 = vmatprep.subr.mxu0 0.0
    %593 = vmatpush1.xpose.msra.mxu0 0.0
    %594 = vmatprep.subr.mxu0 0.0
    %595 = vmatpush1.xpose.msra.mxu0 0.0
    %596 = vmatprep.subr.mxu0 0.0
    %597 = vmatpush1.xpose.msra.mxu0 0.0
    %598 = vmatprep.subr.mxu0 0.0
    %599 = vmatpush1.xpose.msra.mxu0 0.0
    %600 = vmatprep.subr.mxu0 0.0
    %601 = vmatpush1.xpose.msra.mxu0 0.0
    %602 = vmatprep.subr.mxu0 0.0
    %603 = vmatpush1.xpose.msra.mxu0 0.0
    %604 = vmatprep.subr.mxu0 0.0
    %605 = vmatpush1.xpose.msra.mxu0 0.0
    %606 = vmatprep.subr.mxu0 0.0
    %607 = vmatpush1.xpose.msra.mxu0 0.0
    %608 = vmatprep.subr.mxu0 0.0
    %609 = vmatpush1.xpose.msra.mxu0 0.0
    %610 = vmatprep.subr.mxu0 0.0
    %611 = vmatpush1.xpose.msra.mxu0 0.0
    %612 = vmatprep.subr.mxu0 0.0
    %613 = vmatpush1.xpose.msra.mxu0 0.0
    %614 = vmatprep.subr.mxu0 0.0
    %615 = vmatpush1.xpose.msra.mxu0 0.0
    %616 = vmatprep.subr.mxu0 0.0
    %617 = vmatpush1.xpose.msra.mxu0 0.0
    %618 = vmatprep.subr.mxu0 0.0
    %619 = vmatpush1.xpose.msra.mxu0 0.0
    %620 = vmatprep.subr.mxu0 0.0
    %621 = vmatpush1.xpose.msra.mxu0 0.0
    %622 = vmatprep.subr.mxu0 0.0
    %623 = vmatpush1.xpose.msra.mxu0 0.0
    %624 = vmatprep.mubr.f32.mxu0 0.0
    %625 = vmatmul.mubr.f32.gmra.mrb[0].mxu0 0.0
    %v626 = vpop.f32.mrb[0].mxu0
    %v627 = vadd.f32 %v555, %v626
    %v628 = vpop.f32.mrb[0].mxu0
    %629 = vdwg.mxu0
    %630 = vmatprep.subr.mxu0 0.0
    %v631 = vand.u32 %v391, 4294901760
    %632 = vmatpush1.xpose.msra.mxu0 %v631
    %633 = vmatprep.subr.mxu0 0.0
    %634 = vmatpush1.xpose.msra.mxu0 0.0
    %635 = vmatprep.subr.mxu0 0.0
    %636 = vmatpush1.xpose.msra.mxu0 0.0
    %637 = vmatprep.subr.mxu0 0.0
    %638 = vmatpush1.xpose.msra.mxu0 0.0
    %639 = vmatprep.subr.mxu0 0.0
    %640 = vmatpush1.xpose.msra.mxu0 0.0
    %641 = vmatprep.subr.mxu0 0.0
    %642 = vmatpush1.xpose.msra.mxu0 0.0
    %643 = vmatprep.subr.mxu0 0.0
    %644 = vmatpush1.xpose.msra.mxu0 0.0
    %645 = vmatprep.subr.mxu0 0.0
    %646 = vmatpush1.xpose.msra.mxu0 0.0
    %647 = vmatprep.subr.mxu0 0.0
    %648 = vmatpush1.xpose.msra.mxu0 0.0
    %649 = vmatprep.subr.mxu0 0.0
    %650 = vmatpush1.xpose.msra.mxu0 0.0
    %651 = vmatprep.subr.mxu0 0.0
    %652 = vmatpush1.xpose.msra.mxu0 0.0
    %653 = vmatprep.subr.mxu0 0.0
    %654 = vmatpush1.xpose.msra.mxu0 0.0
    %655 = vmatprep.subr.mxu0 0.0
    %656 = vmatpush1.xpose.msra.mxu0 0.0
    %657 = vmatprep.subr.mxu0 0.0
    %658 = vmatpush1.xpose.msra.mxu0 0.0
    %659 = vmatprep.subr.mxu0 0.0
    %660 = vmatpush1.xpose.msra.mxu0 0.0
    %661 = vmatprep.subr.mxu0 0.0
    %662 = vmatpush1.xpose.msra.mxu0 0.0
    %663 = vmatprep.subr.mxu0 0.0
    %664 = vmatpush1.xpose.msra.mxu0 0.0
    %665 = vmatprep.subr.mxu0 0.0
    %666 = vmatpush1.xpose.msra.mxu0 0.0
    %667 = vmatprep.subr.mxu0 0.0
    %668 = vmatpush1.xpose.msra.mxu0 0.0
    %669 = vmatprep.subr.mxu0 0.0
    %670 = vmatpush1.xpose.msra.mxu0 0.0
    %671 = vmatprep.subr.mxu0 0.0
    %672 = vmatpush1.xpose.msra.mxu0 0.0
    %673 = vmatprep.subr.mxu0 0.0
    %674 = vmatpush1.xpose.msra.mxu0 0.0
    %675 = vmatprep.subr.mxu0 0.0
    %676 = vmatpush1.xpose.msra.mxu0 0.0
    %677 = vmatprep.subr.mxu0 0.0
    %678 = vmatpush1.xpose.msra.mxu0 0.0
    %679 = vmatprep.subr.mxu0 0.0
    %680 = vmatpush1.xpose.msra.mxu0 0.0
    %681 = vmatprep.subr.mxu0 0.0
    %682 = vmatpush1.xpose.msra.mxu0 0.0
    %683 = vmatprep.subr.mxu0 0.0
    %684 = vmatpush1.xpose.msra.mxu0 0.0
    %685 = vmatprep.subr.mxu0 0.0
    %686 = vmatpush1.xpose.msra.mxu0 0.0
    %687 = vmatprep.subr.mxu0 0.0
    %688 = vmatpush1.xpose.msra.mxu0 0.0
    %689 = vmatprep.subr.mxu0 0.0
    %690 = vmatpush1.xpose.msra.mxu0 0.0
    %691 = vmatprep.subr.mxu0 0.0
    %692 = vmatpush1.xpose.msra.mxu0 0.0
    %693 = vmatprep.subr.mxu0 0.0
    %694 = vmatpush1.xpose.msra.mxu0 0.0
    %695 = vmatprep.mubr.f32.mxu0 0.0
    %696 = vmatmul.mubr.f32.gmra.mrb[0].mxu0 0.0
    %v697 = vpop.f32.mrb[0].mxu0
    %v698 = vadd.f32 %v627, %v697
    %v699 = vpop.f32.mrb[0].mxu0
    %700 = vdwg.mxu0
    %701 = vmatprep.subr.mxu0 0.0
    %v702 = vand.u32 %v391, 4294901760
    %v703 = vsub.f32 %v391, %v702
    %v704 = vand.u32 %v703, 4294901760
    %705 = vmatpush1.xpose.msra.mxu0 %v704
    %706 = vmatprep.subr.mxu0 0.0
    %707 = vmatpush1.xpose.msra.mxu0 0.0
    %708 = vmatprep.subr.mxu0 0.0
    %709 = vmatpush1.xpose.msra.mxu0 0.0
    %710 = vmatprep.subr.mxu0 0.0
    %711 = vmatpush1.xpose.msra.mxu0 0.0
    %712 = vmatprep.subr.mxu0 0.0
    %713 = vmatpush1.xpose.msra.mxu0 0.0
    %714 = vmatprep.subr.mxu0 0.0
    %715 = vmatpush1.xpose.msra.mxu0 0.0
    %716 = vmatprep.subr.mxu0 0.0
    %717 = vmatpush1.xpose.msra.mxu0 0.0
    %718 = vmatprep.subr.mxu0 0.0
    %719 = vmatpush1.xpose.msra.mxu0 0.0
    %720 = vmatprep.subr.mxu0 0.0
    %721 = vmatpush1.xpose.msra.mxu0 0.0
    %722 = vmatprep.subr.mxu0 0.0
    %723 = vmatpush1.xpose.msra.mxu0 0.0
    %724 = vmatprep.subr.mxu0 0.0
    %725 = vmatpush1.xpose.msra.mxu0 0.0
    %726 = vmatprep.subr.mxu0 0.0
    %727 = vmatpush1.xpose.msra.mxu0 0.0
    %728 = vmatprep.subr.mxu0 0.0
    %729 = vmatpush1.xpose.msra.mxu0 0.0
    %730 = vmatprep.subr.mxu0 0.0
    %731 = vmatpush1.xpose.msra.mxu0 0.0
    %732 = vmatprep.subr.mxu0 0.0
    %733 = vmatpush1.xpose.msra.mxu0 0.0
    %734 = vmatprep.subr.mxu0 0.0
    %735 = vmatpush1.xpose.msra.mxu0 0.0
    %736 = vmatprep.subr.mxu0 0.0
    %737 = vmatpush1.xpose.msra.mxu0 0.0
    %738 = vmatprep.subr.mxu0 0.0
    %739 = vmatpush1.xpose.msra.mxu0 0.0
    %740 = vmatprep.subr.mxu0 0.0
    %741 = vmatpush1.xpose.msra.mxu0 0.0
    %742 = vmatprep.subr.mxu0 0.0
    %743 = vmatpush1.xpose.msra.mxu0 0.0
    %744 = vmatprep.subr.mxu0 0.0
    %745 = vmatpush1.xpose.msra.mxu0 0.0
    %746 = vmatprep.subr.mxu0 0.0
    %747 = vmatpush1.xpose.msra.mxu0 0.0
    %748 = vmatprep.subr.mxu0 0.0
    %749 = vmatpush1.xpose.msra.mxu0 0.0
    %750 = vmatprep.subr.mxu0 0.0
    %751 = vmatpush1.xpose.msra.mxu0 0.0
    %752 = vmatprep.subr.mxu0 0.0
    %753 = vmatpush1.xpose.msra.mxu0 0.0
    %754 = vmatprep.subr.mxu0 0.0
    %755 = vmatpush1.xpose.msra.mxu0 0.0
    %756 = vmatprep.subr.mxu0 0.0
    %757 = vmatpush1.xpose.msra.mxu0 0.0
    %758 = vmatprep.subr.mxu0 0.0
    %759 = vmatpush1.xpose.msra.mxu0 0.0
    %760 = vmatprep.subr.mxu0 0.0
    %761 = vmatpush1.xpose.msra.mxu0 0.0
    %762 = vmatprep.subr.mxu0 0.0
    %763 = vmatpush1.xpose.msra.mxu0 0.0
    %764 = vmatprep.subr.mxu0 0.0
    %765 = vmatpush1.xpose.msra.mxu0 0.0
    %766 = vmatprep.subr.mxu0 0.0
    %767 = vmatpush1.xpose.msra.mxu0 0.0
    %768 = vmatprep.mubr.f32.mxu0 0.0
    %769 = vmatmul.mubr.f32.gmra.mrb[0].mxu0 1.0
    %v770 = vpop.f32.mrb[0].mxu0
    %v771 = vadd.f32 %v698, %v770
    %v772 = vpop.f32.mrb[0].mxu0
    %773 = vdwg.mxu0
    %774 = vmatprep.subr.mxu0 0.0
    %v775 = vand.u32 %v391, 4294901760
    %776 = vmatpush1.xpose.msra.mxu0 %v775
    %777 = vmatprep.subr.mxu0 0.0
    %778 = vmatpush1.xpose.msra.mxu0 0.0
    %779 = vmatprep.subr.mxu0 0.0
    %780 = vmatpush1.xpose.msra.mxu0 0.0
    %781 = vmatprep.subr.mxu0 0.0
    %782 = vmatpush1.xpose.msra.mxu0 0.0
    %783 = vmatprep.subr.mxu0 0.0
    %784 = vmatpush1.xpose.msra.mxu0 0.0
    %785 = vmatprep.subr.mxu0 0.0
    %786 = vmatpush1.xpose.msra.mxu0 0.0
    %787 = vmatprep.subr.mxu0 0.0
    %788 = vmatpush1.xpose.msra.mxu0 0.0
    %789 = vmatprep.subr.mxu0 0.0
    %790 = vmatpush1.xpose.msra.mxu0 0.0
    %791 = vmatprep.subr.mxu0 0.0
    %792 = vmatpush1.xpose.msra.mxu0 0.0
    %793 = vmatprep.subr.mxu0 0.0
    %794 = vmatpush1.xpose.msra.mxu0 0.0
    %795 = vmatprep.subr.mxu0 0.0
    %796 = vmatpush1.xpose.msra.mxu0 0.0
    %797 = vmatprep.subr.mxu0 0.0
    %798 = vmatpush1.xpose.msra.mxu0 0.0
    %799 = vmatprep.subr.mxu0 0.0
    %800 = vmatpush1.xpose.msra.mxu0 0.0
    %801 = vmatprep.subr.mxu0 0.0
    %802 = vmatpush1.xpose.msra.mxu0 0.0
    %803 = vmatprep.subr.mxu0 0.0
    %804 = vmatpush1.xpose.msra.mxu0 0.0
    %805 = vmatprep.subr.mxu0 0.0
    %806 = vmatpush1.xpose.msra.mxu0 0.0
    %807 = vmatprep.subr.mxu0 0.0
    %808 = vmatpush1.xpose.msra.mxu0 0.0
    %809 = vmatprep.subr.mxu0 0.0
    %810 = vmatpush1.xpose.msra.mxu0 0.0
    %811 = vmatprep.subr.mxu0 0.0
    %812 = vmatpush1.xpose.msra.mxu0 0.0
    %813 = vmatprep.subr.mxu0 0.0
    %814 = vmatpush1.xpose.msra.mxu0 0.0
    %815 = vmatprep.subr.mxu0 0.0
    %816 = vmatpush1.xpose.msra.mxu0 0.0
    %817 = vmatprep.subr.mxu0 0.0
    %818 = vmatpush1.xpose.msra.mxu0 0.0
    %819 = vmatprep.subr.mxu0 0.0
    %820 = vmatpush1.xpose.msra.mxu0 0.0
    %821 = vmatprep.subr.mxu0 0.0
    %822 = vmatpush1.xpose.msra.mxu0 0.0
    %823 = vmatprep.subr.mxu0 0.0
    %824 = vmatpush1.xpose.msra.mxu0 0.0
    %825 = vmatprep.subr.mxu0 0.0
    %826 = vmatpush1.xpose.msra.mxu0 0.0
    %827 = vmatprep.subr.mxu0 0.0
    %828 = vmatpush1.xpose.msra.mxu0 0.0
    %829 = vmatprep.subr.mxu0 0.0
    %830 = vmatpush1.xpose.msra.mxu0 0.0
    %831 = vmatprep.subr.mxu0 0.0
    %832 = vmatpush1.xpose.msra.mxu0 0.0
    %833 = vmatprep.subr.mxu0 0.0
    %834 = vmatpush1.xpose.msra.mxu0 0.0
    %835 = vmatprep.subr.mxu0 0.0
    %836 = vmatpush1.xpose.msra.mxu0 0.0
    %837 = vmatprep.subr.mxu0 0.0
    %838 = vmatpush1.xpose.msra.mxu0 0.0
    %839 = vmatprep.mubr.f32.mxu0 0.0
    %840 = vmatmul.mubr.f32.gmra.mrb[0].mxu0 1.0
    %v841 = vpop.f32.mrb[0].mxu0
    %v842 = vadd.f32 %v771, %v841
    %v843 = vpop.f32.mrb[0].mxu0
    %844 = vdwg.mxu0
    %845 = vmatprep.subr.mxu0 0.0
    %v846 = vand.u32 %v390, 4294901760
    %847 = vmatpush1.xpose.msra.mxu0 %v846
    %848 = vmatprep.subr.mxu0 0.0
    %849 = vmatpush1.xpose.msra.mxu0 0.0
    %850 = vmatprep.subr.mxu0 0.0
    %851 = vmatpush1.xpose.msra.mxu0 0.0
    %852 = vmatprep.subr.mxu0 0.0
    %853 = vmatpush1.xpose.msra.mxu0 0.0
    %854 = vmatprep.subr.mxu0 0.0
    %855 = vmatpush1.xpose.msra.mxu0 0.0
    %856 = vmatprep.subr.mxu0 0.0
    %857 = vmatpush1.xpose.msra.mxu0 0.0
    %858 = vmatprep.subr.mxu0 0.0
    %859 = vmatpush1.xpose.msra.mxu0 0.0
    %860 = vmatprep.subr.mxu0 0.0
    %861 = vmatpush1.xpose.msra.mxu0 0.0
    %862 = vmatprep.subr.mxu0 0.0
    %863 = vmatpush1.xpose.msra.mxu0 0.0
    %864 = vmatprep.subr.mxu0 0.0
    %865 = vmatpush1.xpose.msra.mxu0 0.0
    %866 = vmatprep.subr.mxu0 0.0
    %867 = vmatpush1.xpose.msra.mxu0 0.0
    %868 = vmatprep.subr.mxu0 0.0
    %869 = vmatpush1.xpose.msra.mxu0 0.0
    %870 = vmatprep.subr.mxu0 0.0
    %871 = vmatpush1.xpose.msra.mxu0 0.0
    %872 = vmatprep.subr.mxu0 0.0
    %873 = vmatpush1.xpose.msra.mxu0 0.0
    %874 = vmatprep.subr.mxu0 0.0
    %875 = vmatpush1.xpose.msra.mxu0 0.0
    %876 = vmatprep.subr.mxu0 0.0
    %877 = vmatpush1.xpose.msra.mxu0 0.0
    %878 = vmatprep.subr.mxu0 0.0
    %879 = vmatpush1.xpose.msra.mxu0 0.0
    %880 = vmatprep.subr.mxu0 0.0
    %881 = vmatpush1.xpose.msra.mxu0 0.0
    %882 = vmatprep.subr.mxu0 0.0
    %883 = vmatpush1.xpose.msra.mxu0 0.0
    %884 = vmatprep.subr.mxu0 0.0
    %885 = vmatpush1.xpose.msra.mxu0 0.0
    %886 = vmatprep.subr.mxu0 0.0
    %887 = vmatpush1.xpose.msra.mxu0 0.0
    %888 = vmatprep.subr.mxu0 0.0
    %889 = vmatpush1.xpose.msra.mxu0 0.0
    %890 = vmatprep.subr.mxu0 0.0
    %891 = vmatpush1.xpose.msra.mxu0 0.0
    %892 = vmatprep.subr.mxu0 0.0
    %893 = vmatpush1.xpose.msra.mxu0 0.0
    %894 = vmatprep.subr.mxu0 0.0
    %895 = vmatpush1.xpose.msra.mxu0 0.0
    %896 = vmatprep.subr.mxu0 0.0
    %897 = vmatpush1.xpose.msra.mxu0 0.0
    %898 = vmatprep.subr.mxu0 0.0
    %899 = vmatpush1.xpose.msra.mxu0 0.0
    %900 = vmatprep.subr.mxu0 0.0
    %901 = vmatpush1.xpose.msra.mxu0 0.0
    %902 = vmatprep.subr.mxu0 0.0
    %903 = vmatpush1.xpose.msra.mxu0 0.0
    %904 = vmatprep.subr.mxu0 0.0
    %905 = vmatpush1.xpose.msra.mxu0 0.0
    %906 = vmatprep.subr.mxu0 0.0
    %907 = vmatpush1.xpose.msra.mxu0 0.0
    %908 = vmatprep.subr.mxu0 0.0
    %909 = vmatpush1.xpose.msra.mxu0 0.0
    %910 = vmatprep.mubr.f32.mxu0 0.0
    %911 = vmatmul.mubr.f32.gmra.mrb[0].mxu0 0.0
    %v912 = vpop.f32.mrb[0].mxu0
    %v913 = vadd.f32 %v842, %v912
    %v914 = vpop.f32.mrb[0].mxu0
    %915 = vdwg.mxu0
    %916 = vmatprep.subr.mxu0 0.0
    %v917 = vand.u32 %v390, 4294901760
    %v918 = vsub.f32 %v390, %v917
    %v919 = vand.u32 %v918, 4294901760
    %v920 = vsub.f32 %v918, %v919
    %v921 = vand.u32 %v920, 4294901760
    %922 = vmatpush1.xpose.msra.mxu0 %v921
    %923 = vmatprep.subr.mxu0 0.0
    %924 = vmatpush1.xpose.msra.mxu0 0.0
    %925 = vmatprep.subr.mxu0 0.0
    %926 = vmatpush1.xpose.msra.mxu0 0.0
    %927 = vmatprep.subr.mxu0 0.0
    %928 = vmatpush1.xpose.msra.mxu0 0.0
    %929 = vmatprep.subr.mxu0 0.0
    %930 = vmatpush1.xpose.msra.mxu0 0.0
    %931 = vmatprep.subr.mxu0 0.0
    %932 = vmatpush1.xpose.msra.mxu0 0.0
    %933 = vmatprep.subr.mxu0 0.0
    %934 = vmatpush1.xpose.msra.mxu0 0.0
    %935 = vmatprep.subr.mxu0 0.0
    %936 = vmatpush1.xpose.msra.mxu0 0.0
    %937 = vmatprep.subr.mxu0 0.0
    %938 = vmatpush1.xpose.msra.mxu0 0.0
    %939 = vmatprep.subr.mxu0 0.0
    %940 = vmatpush1.xpose.msra.mxu0 0.0
    %941 = vmatprep.subr.mxu0 0.0
    %942 = vmatpush1.xpose.msra.mxu0 0.0
    %943 = vmatprep.subr.mxu0 0.0
    %944 = vmatpush1.xpose.msra.mxu0 0.0
    %945 = vmatprep.subr.mxu0 0.0
    %946 = vmatpush1.xpose.msra.mxu0 0.0
    %947 = vmatprep.subr.mxu0 0.0
    %948 = vmatpush1.xpose.msra.mxu0 0.0
    %949 = vmatprep.subr.mxu0 0.0
    %950 = vmatpush1.xpose.msra.mxu0 0.0
    %951 = vmatprep.subr.mxu0 0.0
    %952 = vmatpush1.xpose.msra.mxu0 0.0
    %953 = vmatprep.subr.mxu0 0.0
    %954 = vmatpush1.xpose.msra.mxu0 0.0
    %955 = vmatprep.subr.mxu0 0.0
    %956 = vmatpush1.xpose.msra.mxu0 0.0
    %957 = vmatprep.subr.mxu0 0.0
    %958 = vmatpush1.xpose.msra.mxu0 0.0
    %959 = vmatprep.subr.mxu0 0.0
    %960 = vmatpush1.xpose.msra.mxu0 0.0
    %961 = vmatprep.subr.mxu0 0.0
    %962 = vmatpush1.xpose.msra.mxu0 0.0
    %963 = vmatprep.subr.mxu0 0.0
    %964 = vmatpush1.xpose.msra.mxu0 0.0
    %965 = vmatprep.subr.mxu0 0.0
    %966 = vmatpush1.xpose.msra.mxu0 0.0
    %967 = vmatprep.subr.mxu0 0.0
    %968 = vmatpush1.xpose.msra.mxu0 0.0
    %969 = vmatprep.subr.mxu0 0.0
    %970 = vmatpush1.xpose.msra.mxu0 0.0
    %971 = vmatprep.subr.mxu0 0.0
    %972 = vmatpush1.xpose.msra.mxu0 0.0
    %973 = vmatprep.subr.mxu0 0.0
    %974 = vmatpush1.xpose.msra.mxu0 0.0
    %975 = vmatprep.subr.mxu0 0.0
    %976 = vmatpush1.xpose.msra.mxu0 0.0
    %977 = vmatprep.subr.mxu0 0.0
    %978 = vmatpush1.xpose.msra.mxu0 0.0
    %979 = vmatprep.subr.mxu0 0.0
    %980 = vmatpush1.xpose.msra.mxu0 0.0
    %981 = vmatprep.subr.mxu0 0.0
    %982 = vmatpush1.xpose.msra.mxu0 0.0
    %983 = vmatprep.subr.mxu0 0.0
    %984 = vmatpush1.xpose.msra.mxu0 0.0
    %985 = vmatprep.mubr.f32.mxu0 0.0
    %986 = vmatmul.mubr.f32.gmra.mrb[0].mxu0 1.0
    %v987 = vpop.f32.mrb[0].mxu0
    %v988 = vadd.f32 %v913, %v987
    %v989 = vpop.f32.mrb[0].mxu0
    %990 = vdwg.mxu0
    %991 = vmatprep.subr.mxu0 0.0
    %v992 = vand.u32 %v390, 4294901760
    %v993 = vsub.f32 %v390, %v992
    %994 = vmatpush1.xpose.msra.mxu0 %v993
    %995 = vmatprep.subr.mxu0 0.0
    %996 = vmatpush1.xpose.msra.mxu0 0.0
    %997 = vmatprep.subr.mxu0 0.0
    %998 = vmatpush1.xpose.msra.mxu0 0.0
    %999 = vmatprep.subr.mxu0 0.0
    %1000 = vmatpush1.xpose.msra.mxu0 0.0
    %1001 = vmatprep.subr.mxu0 0.0
    %1002 = vmatpush1.xpose.msra.mxu0 0.0
    %1003 = vmatprep.subr.mxu0 0.0
    %1004 = vmatpush1.xpose.msra.mxu0 0.0
    %1005 = vmatprep.subr.mxu0 0.0
    %1006 = vmatpush1.xpose.msra.mxu0 0.0
    %1007 = vmatprep.subr.mxu0 0.0
    %1008 = vmatpush1.xpose.msra.mxu0 0.0
    %1009 = vmatprep.subr.mxu0 0.0
    %1010 = vmatpush1.xpose.msra.mxu0 0.0
    %1011 = vmatprep.subr.mxu0 0.0
    %1012 = vmatpush1.xpose.msra.mxu0 0.0
    %1013 = vmatprep.subr.mxu0 0.0
    %1014 = vmatpush1.xpose.msra.mxu0 0.0
    %1015 = vmatprep.subr.mxu0 0.0
    %1016 = vmatpush1.xpose.msra.mxu0 0.0
    %1017 = vmatprep.subr.mxu0 0.0
    %1018 = vmatpush1.xpose.msra.mxu0 0.0
    %1019 = vmatprep.subr.mxu0 0.0
    %1020 = vmatpush1.xpose.msra.mxu0 0.0
    %1021 = vmatprep.subr.mxu0 0.0
    %1022 = vmatpush1.xpose.msra.mxu0 0.0
    %1023 = vmatprep.subr.mxu0 0.0
    %1024 = vmatpush1.xpose.msra.mxu0 0.0
    %1025 = vmatprep.subr.mxu0 0.0
    %1026 = vmatpush1.xpose.msra.mxu0 0.0
    %1027 = vmatprep.subr.mxu0 0.0
    %1028 = vmatpush1.xpose.msra.mxu0 0.0
    %1029 = vmatprep.subr.mxu0 0.0
    %1030 = vmatpush1.xpose.msra.mxu0 0.0
    %1031 = vmatprep.subr.mxu0 0.0
    %1032 = vmatpush1.xpose.msra.mxu0 0.0
    %1033 = vmatprep.subr.mxu0 0.0
    %1034 = vmatpush1.xpose.msra.mxu0 0.0
    %1035 = vmatprep.subr.mxu0 0.0
    %1036 = vmatpush1.xpose.msra.mxu0 0.0
    %1037 = vmatprep.subr.mxu0 0.0
    %1038 = vmatpush1.xpose.msra.mxu0 0.0
    %1039 = vmatprep.subr.mxu0 0.0
    %1040 = vmatpush1.xpose.msra.mxu0 0.0
    %1041 = vmatprep.subr.mxu0 0.0
    %1042 = vmatpush1.xpose.msra.mxu0 0.0
    %1043 = vmatprep.subr.mxu0 0.0
    %1044 = vmatpush1.xpose.msra.mxu0 0.0
    %1045 = vmatprep.subr.mxu0 0.0
    %1046 = vmatpush1.xpose.msra.mxu0 0.0
    %1047 = vmatprep.subr.mxu0 0.0
    %1048 = vmatpush1.xpose.msra.mxu0 0.0
    %1049 = vmatprep.subr.mxu0 0.0
    %1050 = vmatpush1.xpose.msra.mxu0 0.0
    %1051 = vmatprep.subr.mxu0 0.0
    %1052 = vmatpush1.xpose.msra.mxu0 0.0
    %1053 = vmatprep.subr.mxu0 0.0
    %1054 = vmatpush1.xpose.msra.mxu0 0.0
    %1055 = vmatprep.subr.mxu0 0.0
    %1056 = vmatpush1.xpose.msra.mxu0 0.0
    %1057 = vmatprep.mubr.f32.mxu0 0.0
    %1058 = vmatmul.mubr.f32.gmra.mrb[0].mxu0 0.0
    %v1059 = vpop.f32.mrb[0].mxu0
    %v1060 = vadd.f32 %v988, %v1059
    %v1061 = vpop.f32.mrb[0].mxu0
    %1062 = vdwg.mxu0
    %1063 = vmatprep.subr.mxu0 0.0
    %v1064 = vand.u32 %v390, 4294901760
    %1065 = vmatpush1.xpose.msra.mxu0 %v1064
    %1066 = vmatprep.subr.mxu0 0.0
    %1067 = vmatpush1.xpose.msra.mxu0 0.0
    %1068 = vmatprep.subr.mxu0 0.0
    %1069 = vmatpush1.xpose.msra.mxu0 0.0
    %1070 = vmatprep.subr.mxu0 0.0
    %1071 = vmatpush1.xpose.msra.mxu0 0.0
    %1072 = vmatprep.subr.mxu0 0.0
    %1073 = vmatpush1.xpose.msra.mxu0 0.0
    %1074 = vmatprep.subr.mxu0 0.0
    %1075 = vmatpush1.xpose.msra.mxu0 0.0
    %1076 = vmatprep.subr.mxu0 0.0
    %1077 = vmatpush1.xpose.msra.mxu0 0.0
    %1078 = vmatprep.subr.mxu0 0.0
    %1079 = vmatpush1.xpose.msra.mxu0 0.0
    %1080 = vmatprep.subr.mxu0 0.0
    %1081 = vmatpush1.xpose.msra.mxu0 0.0
    %1082 = vmatprep.subr.mxu0 0.0
    %1083 = vmatpush1.xpose.msra.mxu0 0.0
    %1084 = vmatprep.subr.mxu0 0.0
    %1085 = vmatpush1.xpose.msra.mxu0 0.0
    %1086 = vmatprep.subr.mxu0 0.0
    %1087 = vmatpush1.xpose.msra.mxu0 0.0
    %1088 = vmatprep.subr.mxu0 0.0
    %1089 = vmatpush1.xpose.msra.mxu0 0.0
    %1090 = vmatprep.subr.mxu0 0.0
    %1091 = vmatpush1.xpose.msra.mxu0 0.0
    %1092 = vmatprep.subr.mxu0 0.0
    %1093 = vmatpush1.xpose.msra.mxu0 0.0
    %1094 = vmatprep.subr.mxu0 0.0
    %1095 = vmatpush1.xpose.msra.mxu0 0.0
    %1096 = vmatprep.subr.mxu0 0.0
    %1097 = vmatpush1.xpose.msra.mxu0 0.0
    %1098 = vmatprep.subr.mxu0 0.0
    %1099 = vmatpush1.xpose.msra.mxu0 0.0
    %1100 = vmatprep.subr.mxu0 0.0
    %1101 = vmatpush1.xpose.msra.mxu0 0.0
    %1102 = vmatprep.subr.mxu0 0.0
    %1103 = vmatpush1.xpose.msra.mxu0 0.0
    %1104 = vmatprep.subr.mxu0 0.0
    %1105 = vmatpush1.xpose.msra.mxu0 0.0
    %1106 = vmatprep.subr.mxu0 0.0
    %1107 = vmatpush1.xpose.msra.mxu0 0.0
    %1108 = vmatprep.subr.mxu0 0.0
    %1109 = vmatpush1.xpose.msra.mxu0 0.0
    %1110 = vmatprep.subr.mxu0 0.0
    %1111 = vmatpush1.xpose.msra.mxu0 0.0
    %1112 = vmatprep.subr.mxu0 0.0
    %1113 = vmatpush1.xpose.msra.mxu0 0.0
    %1114 = vmatprep.subr.mxu0 0.0
    %1115 = vmatpush1.xpose.msra.mxu0 0.0
    %1116 = vmatprep.subr.mxu0 0.0
    %1117 = vmatpush1.xpose.msra.mxu0 0.0
    %1118 = vmatprep.subr.mxu0 0.0
    %1119 = vmatpush1.xpose.msra.mxu0 0.0
    %1120 = vmatprep.subr.mxu0 0.0
    %1121 = vmatpush1.xpose.msra.mxu0 0.0
    %1122 = vmatprep.subr.mxu0 0.0
    %1123 = vmatpush1.xpose.msra.mxu0 0.0
    %1124 = vmatprep.subr.mxu0 0.0
    %1125 = vmatpush1.xpose.msra.mxu0 0.0
    %1126 = vmatprep.subr.mxu0 0.0
    %1127 = vmatpush1.xpose.msra.mxu0 0.0
    %1128 = vmatprep.mubr.f32.mxu0 0.0
    %1129 = vmatmul.mubr.f32.gmra.mrb[0].mxu0 0.0
    %v1130 = vpop.f32.mrb[0].mxu0
    %v1131 = vadd.f32 %v1060, %v1130
    %v1132 = vpop.f32.mrb[0].mxu0
    %1133 = vdwg.mxu0
    %1134 = vmatprep.subr.mxu0 0.0
    %v1135 = vand.u32 %v390, 4294901760
    %v1136 = vsub.f32 %v390, %v1135
    %v1137 = vand.u32 %v1136, 4294901760
    %1138 = vmatpush1.xpose.msra.mxu0 %v1137
    %1139 = vmatprep.subr.mxu0 0.0
    %1140 = vmatpush1.xpose.msra.mxu0 0.0
    %1141 = vmatprep.subr.mxu0 0.0
    %1142 = vmatpush1.xpose.msra.mxu0 0.0
    %1143 = vmatprep.subr.mxu0 0.0
    %1144 = vmatpush1.xpose.msra.mxu0 0.0
    %1145 = vmatprep.subr.mxu0 0.0
    %1146 = vmatpush1.xpose.msra.mxu0 0.0
    %1147 = vmatprep.subr.mxu0 0.0
    %1148 = vmatpush1.xpose.msra.mxu0 0.0
    %1149 = vmatprep.subr.mxu0 0.0
    %1150 = vmatpush1.xpose.msra.mxu0 0.0
    %1151 = vmatprep.subr.mxu0 0.0
    %1152 = vmatpush1.xpose.msra.mxu0 0.0
    %1153 = vmatprep.subr.mxu0 0.0
    %1154 = vmatpush1.xpose.msra.mxu0 0.0
    %1155 = vmatprep.subr.mxu0 0.0
    %1156 = vmatpush1.xpose.msra.mxu0 0.0
    %1157 = vmatprep.subr.mxu0 0.0
    %1158 = vmatpush1.xpose.msra.mxu0 0.0
    %1159 = vmatprep.subr.mxu0 0.0
    %1160 = vmatpush1.xpose.msra.mxu0 0.0
    %1161 = vmatprep.subr.mxu0 0.0
    %1162 = vmatpush1.xpose.msra.mxu0 0.0
    %1163 = vmatprep.subr.mxu0 0.0
    %1164 = vmatpush1.xpose.msra.mxu0 0.0
    %1165 = vmatprep.subr.mxu0 0.0
    %1166 = vmatpush1.xpose.msra.mxu0 0.0
    %1167 = vmatprep.subr.mxu0 0.0
    %1168 = vmatpush1.xpose.msra.mxu0 0.0
    %1169 = vmatprep.subr.mxu0 0.0
    %1170 = vmatpush1.xpose.msra.mxu0 0.0
    %1171 = vmatprep.subr.mxu0 0.0
    %1172 = vmatpush1.xpose.msra.mxu0 0.0
    %1173 = vmatprep.subr.mxu0 0.0
    %1174 = vmatpush1.xpose.msra.mxu0 0.0
    %1175 = vmatprep.subr.mxu0 0.0
    %1176 = vmatpush1.xpose.msra.mxu0 0.0
    %1177 = vmatprep.subr.mxu0 0.0
    %1178 = vmatpush1.xpose.msra.mxu0 0.0
    %1179 = vmatprep.subr.mxu0 0.0
    %1180 = vmatpush1.xpose.msra.mxu0 0.0
    %1181 = vmatprep.subr.mxu0 0.0
    %1182 = vmatpush1.xpose.msra.mxu0 0.0
    %1183 = vmatprep.subr.mxu0 0.0
    %1184 = vmatpush1.xpose.msra.mxu0 0.0
    %1185 = vmatprep.subr.mxu0 0.0
    %1186 = vmatpush1.xpose.msra.mxu0 0.0
    %1187 = vmatprep.subr.mxu0 0.0
    %1188 = vmatpush1.xpose.msra.mxu0 0.0
    %1189 = vmatprep.subr.mxu0 0.0
    %1190 = vmatpush1.xpose.msra.mxu0 0.0
    %1191 = vmatprep.subr.mxu0 0.0
    %1192 = vmatpush1.xpose.msra.mxu0 0.0
    %1193 = vmatprep.subr.mxu0 0.0
    %1194 = vmatpush1.xpose.msra.mxu0 0.0
    %1195 = vmatprep.subr.mxu0 0.0
    %1196 = vmatpush1.xpose.msra.mxu0 0.0
    %1197 = vmatprep.subr.mxu0 0.0
    %1198 = vmatpush1.xpose.msra.mxu0 0.0
    %1199 = vmatprep.subr.mxu0 0.0
    %1200 = vmatpush1.xpose.msra.mxu0 0.0
    %1201 = vmatprep.mubr.f32.mxu0 0.0
    %1202 = vmatmul.mubr.f32.gmra.mrb[0].mxu0 1.0
    %v1203 = vpop.f32.mrb[0].mxu0
    %v1204 = vadd.f32 %v1131, %v1203
    %v1205 = vpop.f32.mrb[0].mxu0
    %1206 = vdwg.mxu0
    %1207 = vmatprep.subr.mxu0 0.0
    %v1208 = vand.u32 %v390, 4294901760
    %1209 = vmatpush1.xpose.msra.mxu0 %v1208
    %1210 = vmatprep.subr.mxu0 0.0
    %1211 = vmatpush1.xpose.msra.mxu0 0.0
    %1212 = vmatprep.subr.mxu0 0.0
    %1213 = vmatpush1.xpose.msra.mxu0 0.0
    %1214 = vmatprep.subr.mxu0 0.0
    %1215 = vmatpush1.xpose.msra.mxu0 0.0
    %1216 = vmatprep.subr.mxu0 0.0
    %1217 = vmatpush1.xpose.msra.mxu0 0.0
    %1218 = vmatprep.subr.mxu0 0.0
    %1219 = vmatpush1.xpose.msra.mxu0 0.0
    %1220 = vmatprep.subr.mxu0 0.0
    %1221 = vmatpush1.xpose.msra.mxu0 0.0
    %1222 = vmatprep.subr.mxu0 0.0
    %1223 = vmatpush1.xpose.msra.mxu0 0.0
    %1224 = vmatprep.subr.mxu0 0.0
    %1225 = vmatpush1.xpose.msra.mxu0 0.0
    %1226 = vmatprep.subr.mxu0 0.0
    %1227 = vmatpush1.xpose.msra.mxu0 0.0
    %1228 = vmatprep.subr.mxu0 0.0
    %1229 = vmatpush1.xpose.msra.mxu0 0.0
    %1230 = vmatprep.subr.mxu0 0.0
    %1231 = vmatpush1.xpose.msra.mxu0 0.0
    %1232 = vmatprep.subr.mxu0 0.0
    %1233 = vmatpush1.xpose.msra.mxu0 0.0
    %1234 = vmatprep.subr.mxu0 0.0
    %1235 = vmatpush1.xpose.msra.mxu0 0.0
    %1236 = vmatprep.subr.mxu0 0.0
    %1237 = vmatpush1.xpose.msra.mxu0 0.0
    %1238 = vmatprep.subr.mxu0 0.0
    %1239 = vmatpush1.xpose.msra.mxu0 0.0
    %1240 = vmatprep.subr.mxu0 0.0
    %1241 = vmatpush1.xpose.msra.mxu0 0.0
    %1242 = vmatprep.subr.mxu0 0.0
    %1243 = vmatpush1.xpose.msra.mxu0 0.0
    %1244 = vmatprep.subr.mxu0 0.0
    %1245 = vmatpush1.xpose.msra.mxu0 0.0
    %1246 = vmatprep.subr.mxu0 0.0
    %1247 = vmatpush1.xpose.msra.mxu0 0.0
    %1248 = vmatprep.subr.mxu0 0.0
    %1249 = vmatpush1.xpose.msra.mxu0 0.0
    %1250 = vmatprep.subr.mxu0 0.0
    %1251 = vmatpush1.xpose.msra.mxu0 0.0
    %1252 = vmatprep.subr.mxu0 0.0
    %1253 = vmatpush1.xpose.msra.mxu0 0.0
    %1254 = vmatprep.subr.mxu0 0.0
    %1255 = vmatpush1.xpose.msra.mxu0 0.0
    %1256 = vmatprep.subr.mxu0 0.0
    %1257 = vmatpush1.xpose.msra.mxu0 0.0
    %1258 = vmatprep.subr.mxu0 0.0
    %1259 = vmatpush1.xpose.msra.mxu0 0.0
    %1260 = vmatprep.subr.mxu0 0.0
    %1261 = vmatpush1.xpose.msra.mxu0 0.0
    %1262 = vmatprep.subr.mxu0 0.0
    %1263 = vmatpush1.xpose.msra.mxu0 0.0
    %1264 = vmatprep.subr.mxu0 0.0
    %1265 = vmatpush1.xpose.msra.mxu0 0.0
    %1266 = vmatprep.subr.mxu0 0.0
    %1267 = vmatpush1.xpose.msra.mxu0 0.0
    %1268 = vmatprep.subr.mxu0 0.0
    %1269 = vmatpush1.xpose.msra.mxu0 0.0
    %1270 = vmatprep.subr.mxu0 0.0
    %1271 = vmatpush1.xpose.msra.mxu0 0.0
    %1272 = vmatprep.mubr.f32.mxu0 0.0
    %1273 = vmatmul.mubr.f32.gmra.mrb[0].mxu0 1.0
    %v1274 = vpop.f32.mrb[0].mxu0
    %v1275 = vadd.f32 %v1204, %v1274
    %v1276 = vpop.f32.mrb[0].mxu0
    %1277 = vdwg.mxu0
    %v1278 = vrsqrt.pop %v1275
    %v1279 = vmul.f32 %v1275, %v1278
    %vm1280 = vcmp.eq.f32.partialorder %v1275, inf
    %v1281 = vsel %vm1280, %v1275, %v1279
    %vm1282 = vcmp.eq.f32.partialorder %v1275, 0.0
    %v1283 = vand.u32 %v1275, 2147483648
    %v1284 = vsel %vm1282, %v1283, %v1281
    %s1285 = sld [smem:[#allocation11]]
    %v1286 = vstv %s1285
    %v1287 = vmul.f32 %v1284, %v1286
    %s1288 = sld [smem:[#allocation11 + $0x1]]
    %v1289 = vstv %s1288
    %v1290 = vadd.f32 %v1287, %v1289
    %vm1291 = vcmask 57344
    %1292 = vst.msk [vmem:[#allocation13] sm:$0x1] %vm1291, %v1290
    // Predicated region
    $region50: #{tpu_custom_call.1} parent=1 // pred_check
      _
    $region51: #{tpu_custom_call.1} parent=1 // pred_check_branch
      %1294 = sbr.rel (0) target = $region53
    $region52: #{tpu_custom_call.1} parent=1 // pred_region
      %s1296 = ssub.s32 128, 128
      %1297 = vsyncadd [#allocation4], %s1296
      %s1299 = sshll.u32 [#allocation12], 4
      %s1300 = int_to_ptr.vmem [resolvable:$true] %s1299
      %1302 = dma.vmem_to_hbm [thread:$0]  %s1300, 128, %s7, [#allocation4]
    $region53: #{tpu_custom_call.1} parent=1 // pred_fallthru
      _
    // Predicated region
    $region54: #{tpu_custom_call.1} parent=1 // pred_check
      _
    $region55: #{tpu_custom_call.1} parent=1 // pred_check_branch
      %1304 = sbr.rel (0) target = $region57
    $region56: #{tpu_custom_call.1} parent=1 // pred_region
      %s1306 = ssub.s32 16, 16
      %1307 = vsyncadd [#allocation14], %s1306
      %s1309 = sshll.u32 [#allocation13], 4
      %s1310 = int_to_ptr.vmem [resolvable:$true] %s1309
      %1312 = dma.vmem_to_hbm [thread:$0]  %s1310, 16, %s8, [#allocation14]
    $region57: #{tpu_custom_call.1} parent=1 // pred_fallthru
      _
    // Predicated region
    $region58: #{tpu_custom_call.1} parent=1 // pred_check
      _
    $region59: #{tpu_custom_call.1} parent=1 // pred_check_branch
      %1314 = sbr.rel (0) target = $region61
    $region60: #{tpu_custom_call.1} parent=1 // pred_region
      %1315 = dma.done [#allocation4], 128
    $region61: #{tpu_custom_call.1} parent=1 // pred_fallthru
      _
    // Predicated region
    $region62: #{tpu_custom_call.1} parent=1 // pred_check
      _
    $region63: #{tpu_custom_call.1} parent=1 // pred_check_branch
      %1317 = sbr.rel (0) target = $region65
    $region64: #{tpu_custom_call.1} parent=1 // pred_region
      %1318 = dma.done [#allocation14], 16
    $region65: #{tpu_custom_call.1} parent=1 // pred_fallthru
      _
    %1319 = vsyncpa [#allocation3], 1
    %1320 = vsyncpa [#allocation7], 1
    %1321 = vsyncpa [#allocation10], 1
    %1322 = vsyncpa [#allocation4], 1
    %1323 = vsyncpa [#allocation14], 1
    %1324 = vsyncpa [#allocation5], 1

</llo_original>
